<compile_context>
chip_gen: v5e
topology: v5e:2x2
jax: 0.10.0
libtpu: 0.0.40
codegen_flags: <defaults>
</compile_context>

<pallas_src>
import functools

import jax
import jax.numpy as jnp
from jax.experimental import pallas as pl
from jax.experimental.pallas import tpu as pltpu


def _round_up(x, m):
    return ((x + m - 1) // m) * m


def _pick_tile_rows(H, Wp, Cin, Cmid_p, Cout_p, budget_bytes=24 << 20, max_rows=64):
    """Largest row-tile TH dividing H whose per-step working set fits the VMEM budget."""
    best = 1
    for th in range(1, min(H, max_rows) + 1):
        if H % th:
            continue
        need = (2 * (th + 2) * Wp * Cin * 2        # double-buffered bf16 input tile
                + 2 * (th + 2) * Wp * Cmid_p * 4   # f32 accumulator + partial product
                + 2 * th * Wp * Cout_p * 4)        # double-buffered f32 output tile
        if need <= budget_bytes:
            best = th
    return best


def _make_kernel(Wp, rows_out):
    """Kernel body; Wp (padded width) and rows_out (= TH*Wp) are compile-time ints."""

    def kernel(x_ref, w1_ref, sc_ref, sh_ref, w2_ref, b2_ref, o_ref):
        # x_ref : (1, 1, (TH+2)*Wp, Cin)  bf16, flattened (rows-with-halo, channels)
        # w1_ref: (9, Cin, Cmid_p)        bf16, tap-major 3x3 weights (lane-padded)
        # sc_ref/sh_ref: (1, Cmid_p)      f32 folded BN scale / shift
        # w2_ref: (Cmid_p, Cout_p)        bf16 1x1 weights, b2_ref: (1, Cout_p) f32 bias
        # o_ref : (1, 1, TH*Wp, Cout_p)   f32
        R = x_ref.shape[2]                       # (TH + 2) * Wp
        cmid_p = w1_ref.shape[2]
        xp = x_ref[0, 0]                         # (R, Cin) bf16, no reshape/copy needed

        # 3x3 conv: 9 full-tile matmuls; shift the f32 partial product by (dy, dx)
        # with a sublane roll (XLU) instead of materializing shifted input copies.
        acc = jnp.zeros((R, cmid_p), jnp.float32)
        for dy in range(3):
            for dx in range(3):
                p = jnp.dot(xp, w1_ref[3 * dy + dx],
                            preferred_element_type=jnp.float32)
                s = dy * Wp + dx                 # output row r needs partial row r + s
                if s:
                    p = pltpu.roll(p, R - s, axis=0)   # == jnp.roll(p, -s, axis=0)
                acc = acc + p

        # Folded inference BatchNorm + ReLU (Dropout(0.1) is identity in eval mode).
        y = jnp.maximum(acc * sc_ref[...] + sh_ref[...], 0.0)
        y = y[:rows_out]                         # drop the 2 halo rows (aligned prefix)

        # 1x1 conv + bias, lane-dense (Cout padded to 128) output store.
        out = jnp.dot(y.astype(jnp.bfloat16), w2_ref[...],
                      preferred_element_type=jnp.float32) + b2_ref[...]
        o_ref[0, 0] = out.astype(o_ref.dtype)

    return kernel


def fcn_head_forward(x_nchw, w1, gamma, beta, run_mean, run_var, w2, b2,
                     eps=1e-5, tile_rows=None):
    """Eval-mode _FCNHead forward.  x_nchw: (N, Cin, H, W) f32 -> (N, Cout, H, W) f32."""
    N, Cin, H, W = x_nchw.shape
    Cmid = w1.shape[0]                 # w1: (Cmid, Cin, 3, 3)  (PyTorch layout)
    Cout = w2.shape[0]                 # w2: (Cout, Cmid, 1, 1)
    Cmid_p = _round_up(Cmid, 128)
    Cout_p = _round_up(Cout, 128)
    Wp = _round_up(W + 2, 8)           # conv halo + sublane-friendly row stride

    if tile_rows is None:
        tile_rows = _pick_tile_rows(H, Wp, Cin, Cmid_p, Cout_p)
    TH = tile_rows
    assert H % TH == 0, "tile_rows must divide H"
    nH = H // TH
    R = (TH + 2) * Wp                  # flattened rows per input tile (with halo)
    rows_out = TH * Wp

    # ---- wrapper-side prep (fused by XLA; bf16 halves HBM traffic of the input) ----
    x_nhwc = jnp.transpose(x_nchw, (0, 2, 3, 1)).astype(jnp.bfloat16)
    x_pad = jnp.pad(x_nhwc, ((0, 0), (1, 1), (1, Wp - W - 1), (0, 0)))
    # Pre-gather the 2-row halos so each grid step reads a disjoint block: plain
    # Blocked BlockSpecs -> automatic double-buffered pipelining, both axes parallel.
    # TODO(synk): for very large inputs replace this with an in-kernel halo DMA
    # (memory_space=pl.ANY + make_async_copy) to avoid duplicating halo rows in HBM.
    x_tiles = jnp.stack([x_pad[:, i * TH:i * TH + TH + 2] for i in range(nH)], axis=1)
    x_tiles = x_tiles.reshape(N, nH, R, Cin)

    # 3x3 weights, tap-major, lane-padded, bf16.
    w1_taps = jnp.transpose(w1, (2, 3, 1, 0)).reshape(9, Cin, Cmid)
    w1_taps = jnp.pad(w1_taps, ((0, 0), (0, 0), (0, Cmid_p - Cmid))).astype(jnp.bfloat16)
    # Folded inference BatchNorm (scale/shift); padded lanes stay exactly zero.
    scale = gamma / jnp.sqrt(run_var + eps)
    shift = beta - run_mean * scale
    scale_p = jnp.pad(scale, (0, Cmid_p - Cmid)).reshape(1, Cmid_p).astype(jnp.float32)
    shift_p = jnp.pad(shift, (0, Cmid_p - Cmid)).reshape(1, Cmid_p).astype(jnp.float32)
    # 1x1 conv weights / bias, lane-padded.
    w2_mat = jnp.pad(w2.reshape(Cout, Cmid).T,
                     ((0, Cmid_p - Cmid), (0, Cout_p - Cout))).astype(jnp.bfloat16)
    b2_row = jnp.pad(b2, (0, Cout_p - Cout)).reshape(1, Cout_p).astype(jnp.float32)

    flops = N * H * W * (2 * 9 * Cin * Cmid + 2 * Cmid * Cout)
    bytes_accessed = (x_tiles.size * 2 + w1_taps.size * 2 + w2_mat.size * 2
                      + (scale_p.size + shift_p.size + b2_row.size) * 4
                      + N * nH * rows_out * Cout_p * 4)

    out_t = pl.pallas_call(
        _make_kernel(Wp, rows_out),
        out_shape=jax.ShapeDtypeStruct((N, nH, rows_out, Cout_p), jnp.float32),
        grid_spec=pltpu.PrefetchScalarGridSpec(
            num_scalar_prefetch=0,
            grid=(N, nH),
            in_specs=[
                pl.BlockSpec((1, 1, R, Cin), lambda n, i: (n, i, 0, 0)),
                pl.BlockSpec((9, Cin, Cmid_p), lambda n, i: (0, 0, 0)),
                pl.BlockSpec((1, Cmid_p), lambda n, i: (0, 0)),
                pl.BlockSpec((1, Cmid_p), lambda n, i: (0, 0)),
                pl.BlockSpec((Cmid_p, Cout_p), lambda n, i: (0, 0)),
                pl.BlockSpec((1, Cout_p), lambda n, i: (0, 0)),
            ],
            out_specs=pl.BlockSpec((1, 1, rows_out, Cout_p), lambda n, i: (n, i, 0, 0)),
        ),
        compiler_params=pltpu.CompilerParams(
            dimension_semantics=("parallel", "parallel"),
            vmem_limit_bytes=48 * 1024 * 1024,
        ),
        cost_estimate=pl.CostEstimate(flops=flops, transcendentals=0,
                                      bytes_accessed=bytes_accessed),
    )(x_tiles, w1_taps, scale_p, shift_p, w2_mat, b2_row)

    # (N, nH, TH*Wp, Cout_p) -> drop width/lane padding -> NCHW.
    out = out_t.reshape(N, nH, TH, Wp, Cout_p)[:, :, :, :W, :Cout]
    out = out.reshape(N, H, W, Cout)
    return jnp.transpose(out, (0, 3, 1, 2))


def _reference(x, w1, gamma, beta, run_mean, run_var, w2, b2, eps=1e-5):
    """Pure-JAX f32 reference of eval-mode _FCNHead (sanity check)."""
    N, Cin, H, W = x.shape
    xp = jnp.pad(x, ((0, 0), (0, 0), (1, 1), (1, 1)))
    acc = jnp.zeros((N, w1.shape[0], H, W), jnp.float32)
    for dy in range(3):
        for dx in range(3):
            patch = xp[:, :, dy:dy + H, dx:dx + W]
            acc = acc + jnp.einsum('nchw,mc->nmhw', patch, w1[:, :, dy, dx])
    scale = gamma / jnp.sqrt(run_var + eps)
    shift = beta - run_mean * scale
    y = jnp.maximum(acc * scale[None, :, None, None] + shift[None, :, None, None], 0.0)
    return jnp.einsum('nmhw,om->nohw', y, w2[:, :, 0, 0]) + b2[None, :, None, None]


if __name__ == "__main__":
    key = jax.random.PRNGKey(0)
    N, Cin, H, W = 2, 16, 16, 16
    Cmid = Cin // 4          # inter_channels = in_channels // 4
    Cout = 8                 # `channels` argument of _FCNHead

    k1, k2, k3, k4, k5, k6 = jax.random.split(key, 6)
    x = jax.random.normal(k1, (N, Cin, H, W), jnp.float32)

    # Deterministic synthetic parameters; shapes match the PyTorch module.
    w1 = jax.random.normal(k2, (Cmid, Cin, 3, 3), jnp.float32) * 0.1   # Conv2d 3x3, bias=False
    gamma = 1.0 + 0.1 * jax.random.normal(k3, (Cmid,), jnp.float32)    # BatchNorm2d weight
    beta = 0.1 * jax.random.normal(k4, (Cmid,), jnp.float32)           # BatchNorm2d bias
    run_mean = jnp.zeros((Cmid,), jnp.float32)                         # fresh running stats
    run_var = jnp.ones((Cmid,), jnp.float32)
    w2 = jax.random.normal(k5, (Cout, Cmid, 1, 1), jnp.float32) * 0.1  # Conv2d 1x1
    b2 = 0.1 * jax.random.normal(k6, (Cout,), jnp.float32)

    # tile_rows=8 so the small demo exercises the multi-tile (halo) path: grid = (2, 2).
    fwd = jax.jit(functools.partial(fcn_head_forward, tile_rows=8))
    out = fwd(x, w1, gamma, beta, run_mean, run_var, w2, b2)
    jax.block_until_ready(out)
    assert out.shape == (N, Cout, H, W), out.shape

    ref = _reference(x, w1, gamma, beta, run_mean, run_var, w2, b2)
    err = float(jnp.max(jnp.abs(out - ref)))
    assert err < 0.1, f"max abs error vs f32 reference too large: {err}"
    print("KERNEL_OK")
</pallas_src>

<mosaic_0001>
module attributes {stable_mosaic.version = 11 : i64} {
  func.func @kernel(%arg0: i32, %arg1: i32, %arg2: memref<1x1x240x16xbf16, #tpu.memory_space<vmem>>, %arg3: memref<9x16x128xbf16, #tpu.memory_space<vmem>>, %arg4: memref<1x128xf32, #tpu.memory_space<vmem>>, %arg5: memref<1x128xf32, #tpu.memory_space<vmem>>, %arg6: memref<128x128xbf16, #tpu.memory_space<vmem>>, %arg7: memref<1x128xf32, #tpu.memory_space<vmem>>, %arg8: memref<1x1x192x128xf32, #tpu.memory_space<vmem>>) attributes {dimension_semantics = [#tpu.dimension_semantics<parallel>, #tpu.dimension_semantics<parallel>], iteration_bounds = array<i64: 2, 2>, scalar_prefetch = 0 : i64, scratch_operands = 0 : i64, tpu.core_type = #tpu.core_type<tc>, window_params = [{transform_indices = @transform_0, window_bounds = array<i64: 1, 1, 240, 16>}, {pipeline_mode = #tpu.pipeline_mode<synchronous>, transform_indices = @transform_1, window_bounds = array<i64: 9, 16, 128>}, {pipeline_mode = #tpu.pipeline_mode<synchronous>, transform_indices = @transform_2, window_bounds = array<i64: 1, 128>}, {pipeline_mode = #tpu.pipeline_mode<synchronous>, transform_indices = @transform_3, window_bounds = array<i64: 1, 128>}, {pipeline_mode = #tpu.pipeline_mode<synchronous>, transform_indices = @transform_4, window_bounds = array<i64: 128, 128>}, {pipeline_mode = #tpu.pipeline_mode<synchronous>, transform_indices = @transform_5, window_bounds = array<i64: 1, 128>}, {transform_indices = @transform_6, window_bounds = array<i64: 1, 1, 192, 128>}]} {
    %c0 = arith.constant 0 : index
    %c0_0 = arith.constant 0 : index
    %c0_1 = arith.constant 0 : index
    %c0_2 = arith.constant 0 : index
    %0 = vector.load %arg2[%c0, %c0_0, %c0_1, %c0_2] : memref<1x1x240x16xbf16, #tpu.memory_space<vmem>>, vector<1x1x240x16xbf16>
    %1 = vector.shape_cast %0 : vector<1x1x240x16xbf16> to vector<240x16xbf16>
    %cst = arith.constant 0.000000e+00 : f32
    %2 = vector.broadcast %cst : f32 to vector<240x128xf32>
    %c0_3 = arith.constant 0 : index
    %c0_4 = arith.constant 0 : index
    %c0_5 = arith.constant 0 : index
    %3 = vector.load %arg3[%c0_3, %c0_4, %c0_5] : memref<9x16x128xbf16, #tpu.memory_space<vmem>>, vector<1x16x128xbf16>
    %4 = vector.shape_cast %3 : vector<1x16x128xbf16> to vector<16x128xbf16>
    %cst_6 = arith.constant dense<0.000000e+00> : vector<240x128xf32>
    %5 = tpu.matmul %1, %4, %cst_6 {dimension_numbers = #tpu.dot_dimension_numbers<[1], [0], [0], [1], [0, 0, 1, 1], [], []>} : vector<240x16xbf16>, vector<16x128xbf16>, vector<240x128xf32> -> vector<240x128xf32>
    %6 = arith.addf %2, %5 : vector<240x128xf32>
    %c1 = arith.constant 1 : index
    %c0_7 = arith.constant 0 : index
    %c0_8 = arith.constant 0 : index
    %7 = vector.load %arg3[%c1, %c0_7, %c0_8] : memref<9x16x128xbf16, #tpu.memory_space<vmem>>, vector<1x16x128xbf16>
    %8 = vector.shape_cast %7 : vector<1x16x128xbf16> to vector<16x128xbf16>
    %cst_9 = arith.constant dense<0.000000e+00> : vector<240x128xf32>
    %9 = tpu.matmul %1, %8, %cst_9 {dimension_numbers = #tpu.dot_dimension_numbers<[1], [0], [0], [1], [0, 0, 1, 1], [], []>} : vector<240x16xbf16>, vector<16x128xbf16>, vector<240x128xf32> -> vector<240x128xf32>
    %c239_i32 = arith.constant 239 : i32
    %10 = tpu.dynamic_rotate %9 by %c239_i32 dim 0 : vector<240x128xf32>, i32 -> vector<240x128xf32>
    %11 = arith.addf %6, %10 : vector<240x128xf32>
    %c2 = arith.constant 2 : index
    %c0_10 = arith.constant 0 : index
    %c0_11 = arith.constant 0 : index
    %12 = vector.load %arg3[%c2, %c0_10, %c0_11] : memref<9x16x128xbf16, #tpu.memory_space<vmem>>, vector<1x16x128xbf16>
    %13 = vector.shape_cast %12 : vector<1x16x128xbf16> to vector<16x128xbf16>
    %cst_12 = arith.constant dense<0.000000e+00> : vector<240x128xf32>
    %14 = tpu.matmul %1, %13, %cst_12 {dimension_numbers = #tpu.dot_dimension_numbers<[1], [0], [0], [1], [0, 0, 1, 1], [], []>} : vector<240x16xbf16>, vector<16x128xbf16>, vector<240x128xf32> -> vector<240x128xf32>
    %c238_i32 = arith.constant 238 : i32
    %15 = tpu.dynamic_rotate %14 by %c238_i32 dim 0 : vector<240x128xf32>, i32 -> vector<240x128xf32>
    %16 = arith.addf %11, %15 : vector<240x128xf32>
    %c3 = arith.constant 3 : index
    %c0_13 = arith.constant 0 : index
    %c0_14 = arith.constant 0 : index
    %17 = vector.load %arg3[%c3, %c0_13, %c0_14] : memref<9x16x128xbf16, #tpu.memory_space<vmem>>, vector<1x16x128xbf16>
    %18 = vector.shape_cast %17 : vector<1x16x128xbf16> to vector<16x128xbf16>
    %cst_15 = arith.constant dense<0.000000e+00> : vector<240x128xf32>
    %19 = tpu.matmul %1, %18, %cst_15 {dimension_numbers = #tpu.dot_dimension_numbers<[1], [0], [0], [1], [0, 0, 1, 1], [], []>} : vector<240x16xbf16>, vector<16x128xbf16>, vector<240x128xf32> -> vector<240x128xf32>
    %c216_i32 = arith.constant 216 : i32
    %20 = tpu.dynamic_rotate %19 by %c216_i32 dim 0 : vector<240x128xf32>, i32 -> vector<240x128xf32>
    %21 = arith.addf %16, %20 : vector<240x128xf32>
    %c4 = arith.constant 4 : index
    %c0_16 = arith.constant 0 : index
    %c0_17 = arith.constant 0 : index
    %22 = vector.load %arg3[%c4, %c0_16, %c0_17] : memref<9x16x128xbf16, #tpu.memory_space<vmem>>, vector<1x16x128xbf16>
    %23 = vector.shape_cast %22 : vector<1x16x128xbf16> to vector<16x128xbf16>
    %cst_18 = arith.constant dense<0.000000e+00> : vector<240x128xf32>
    %24 = tpu.matmul %1, %23, %cst_18 {dimension_numbers = #tpu.dot_dimension_numbers<[1], [0], [0], [1], [0, 0, 1, 1], [], []>} : vector<240x16xbf16>, vector<16x128xbf16>, vector<240x128xf32> -> vector<240x128xf32>
    %c215_i32 = arith.constant 215 : i32
    %25 = tpu.dynamic_rotate %24 by %c215_i32 dim 0 : vector<240x128xf32>, i32 -> vector<240x128xf32>
    %26 = arith.addf %21, %25 : vector<240x128xf32>
    %c5 = arith.constant 5 : index
    %c0_19 = arith.constant 0 : index
    %c0_20 = arith.constant 0 : index
    %27 = vector.load %arg3[%c5, %c0_19, %c0_20] : memref<9x16x128xbf16, #tpu.memory_space<vmem>>, vector<1x16x128xbf16>
    %28 = vector.shape_cast %27 : vector<1x16x128xbf16> to vector<16x128xbf16>
    %cst_21 = arith.constant dense<0.000000e+00> : vector<240x128xf32>
    %29 = tpu.matmul %1, %28, %cst_21 {dimension_numbers = #tpu.dot_dimension_numbers<[1], [0], [0], [1], [0, 0, 1, 1], [], []>} : vector<240x16xbf16>, vector<16x128xbf16>, vector<240x128xf32> -> vector<240x128xf32>
    %c214_i32 = arith.constant 214 : i32
    %30 = tpu.dynamic_rotate %29 by %c214_i32 dim 0 : vector<240x128xf32>, i32 -> vector<240x128xf32>
    %31 = arith.addf %26, %30 : vector<240x128xf32>
    %c6 = arith.constant 6 : index
    %c0_22 = arith.constant 0 : index
    %c0_23 = arith.constant 0 : index
    %32 = vector.load %arg3[%c6, %c0_22, %c0_23] : memref<9x16x128xbf16, #tpu.memory_space<vmem>>, vector<1x16x128xbf16>
    %33 = vector.shape_cast %32 : vector<1x16x128xbf16> to vector<16x128xbf16>
    %cst_24 = arith.constant dense<0.000000e+00> : vector<240x128xf32>
    %34 = tpu.matmul %1, %33, %cst_24 {dimension_numbers = #tpu.dot_dimension_numbers<[1], [0], [0], [1], [0, 0, 1, 1], [], []>} : vector<240x16xbf16>, vector<16x128xbf16>, vector<240x128xf32> -> vector<240x128xf32>
    %c192_i32 = arith.constant 192 : i32
    %35 = tpu.dynamic_rotate %34 by %c192_i32 dim 0 : vector<240x128xf32>, i32 -> vector<240x128xf32>
    %36 = arith.addf %31, %35 : vector<240x128xf32>
    %c7 = arith.constant 7 : index
    %c0_25 = arith.constant 0 : index
    %c0_26 = arith.constant 0 : index
    %37 = vector.load %arg3[%c7, %c0_25, %c0_26] : memref<9x16x128xbf16, #tpu.memory_space<vmem>>, vector<1x16x128xbf16>
    %38 = vector.shape_cast %37 : vector<1x16x128xbf16> to vector<16x128xbf16>
    %cst_27 = arith.constant dense<0.000000e+00> : vector<240x128xf32>
    %39 = tpu.matmul %1, %38, %cst_27 {dimension_numbers = #tpu.dot_dimension_numbers<[1], [0], [0], [1], [0, 0, 1, 1], [], []>} : vector<240x16xbf16>, vector<16x128xbf16>, vector<240x128xf32> -> vector<240x128xf32>
    %c191_i32 = arith.constant 191 : i32
    %40 = tpu.dynamic_rotate %39 by %c191_i32 dim 0 : vector<240x128xf32>, i32 -> vector<240x128xf32>
    %41 = arith.addf %36, %40 : vector<240x128xf32>
    %c8 = arith.constant 8 : index
    %c0_28 = arith.constant 0 : index
    %c0_29 = arith.constant 0 : index
    %42 = vector.load %arg3[%c8, %c0_28, %c0_29] : memref<9x16x128xbf16, #tpu.memory_space<vmem>>, vector<1x16x128xbf16>
    %43 = vector.shape_cast %42 : vector<1x16x128xbf16> to vector<16x128xbf16>
    %cst_30 = arith.constant dense<0.000000e+00> : vector<240x128xf32>
    %44 = tpu.matmul %1, %43, %cst_30 {dimension_numbers = #tpu.dot_dimension_numbers<[1], [0], [0], [1], [0, 0, 1, 1], [], []>} : vector<240x16xbf16>, vector<16x128xbf16>, vector<240x128xf32> -> vector<240x128xf32>
    %c190_i32 = arith.constant 190 : i32
    %45 = tpu.dynamic_rotate %44 by %c190_i32 dim 0 : vector<240x128xf32>, i32 -> vector<240x128xf32>
    %46 = arith.addf %41, %45 : vector<240x128xf32>
    %c0_31 = arith.constant 0 : index
    %c0_32 = arith.constant 0 : index
    %47 = vector.load %arg4[%c0_31, %c0_32] : memref<1x128xf32, #tpu.memory_space<vmem>>, vector<1x128xf32>
    %48 = vector.broadcast %47 : vector<1x128xf32> to vector<240x128xf32>
    %49 = arith.mulf %46, %48 : vector<240x128xf32>
    %c0_33 = arith.constant 0 : index
    %c0_34 = arith.constant 0 : index
    %50 = vector.load %arg5[%c0_33, %c0_34] : memref<1x128xf32, #tpu.memory_space<vmem>>, vector<1x128xf32>
    %51 = vector.broadcast %50 : vector<1x128xf32> to vector<240x128xf32>
    %52 = arith.addf %49, %51 : vector<240x128xf32>
    %cst_35 = arith.constant 0.000000e+00 : f32
    %53 = vector.broadcast %cst_35 : f32 to vector<240x128xf32>
    %54 = arith.maximumf %52, %53 : vector<240x128xf32>
    %55 = vector.extract_strided_slice %54 {offsets = [0, 0], sizes = [192, 128], strides = [1, 1]} : vector<240x128xf32> to vector<192x128xf32>
    %56 = arith.truncf %55 : vector<192x128xf32> to vector<192x128xbf16>
    %c0_36 = arith.constant 0 : index
    %c0_37 = arith.constant 0 : index
    %57 = vector.load %arg6[%c0_36, %c0_37] : memref<128x128xbf16, #tpu.memory_space<vmem>>, vector<128x128xbf16>
    %cst_38 = arith.constant dense<0.000000e+00> : vector<192x128xf32>
    %58 = tpu.matmul %56, %57, %cst_38 {dimension_numbers = #tpu.dot_dimension_numbers<[1], [0], [0], [1], [0, 0, 1, 1], [], []>} : vector<192x128xbf16>, vector<128x128xbf16>, vector<192x128xf32> -> vector<192x128xf32>
    %c0_39 = arith.constant 0 : index
    %c0_40 = arith.constant 0 : index
    %59 = vector.load %arg7[%c0_39, %c0_40] : memref<1x128xf32, #tpu.memory_space<vmem>>, vector<1x128xf32>
    %60 = vector.broadcast %59 : vector<1x128xf32> to vector<192x128xf32>
    %61 = arith.addf %58, %60 : vector<192x128xf32>
    %c0_41 = arith.constant 0 : index
    %c0_42 = arith.constant 0 : index
    %c0_43 = arith.constant 0 : index
    %c0_44 = arith.constant 0 : index
    %62 = vector.load %arg8[%c0_41, %c0_42, %c0_43, %c0_44] : memref<1x1x192x128xf32, #tpu.memory_space<vmem>>, vector<1x1x192x128xf32>
    %63 = vector.shape_cast %62 : vector<1x1x192x128xf32> to vector<192x128xf32>
    %64 = vector.shape_cast %61 : vector<192x128xf32> to vector<1x1x192x128xf32>
    tpu.vector_store %arg8[%c0_41, %c0_42, %c0_43, %c0_44], %64 {strides = array<i32>} : memref<1x1x192x128xf32, #tpu.memory_space<vmem>>, vector<1x1x192x128xf32>,
    return
  }
  func.func @transform_0(%arg0: i32, %arg1: i32) -> (i32, i32, i32, i32) {
    %c0_i32 = arith.constant 0 : i32
    %c0_i32_0 = arith.constant 0 : i32
    %c0_i32_1 = arith.constant 0 : i32
    return %arg0, %arg1, %c0_i32, %c0_i32_0 : i32, i32, i32, i32
  }
  func.func @transform_1(%arg0: i32, %arg1: i32) -> (i32, i32, i32) {
    %c0_i32 = arith.constant 0 : i32
    %c0_i32_0 = arith.constant 0 : i32
    %c0_i32_1 = arith.constant 0 : i32
    %c0_i32_2 = arith.constant 0 : i32
    return %c0_i32, %c0_i32_0, %c0_i32_1 : i32, i32, i32
  }
  func.func @transform_2(%arg0: i32, %arg1: i32) -> (i32, i32) {
    %c0_i32 = arith.constant 0 : i32
    %c0_i32_0 = arith.constant 0 : i32
    %c0_i32_1 = arith.constant 0 : i32
    return %c0_i32, %c0_i32_0 : i32, i32
  }
  func.func @transform_3(%arg0: i32, %arg1: i32) -> (i32, i32) {
    %c0_i32 = arith.constant 0 : i32
    %c0_i32_0 = arith.constant 0 : i32
    %c0_i32_1 = arith.constant 0 : i32
    return %c0_i32, %c0_i32_0 : i32, i32
  }
  func.func @transform_4(%arg0: i32, %arg1: i32) -> (i32, i32) {
    %c0_i32 = arith.constant 0 : i32
    %c0_i32_0 = arith.constant 0 : i32
    %c0_i32_1 = arith.constant 0 : i32
    return %c0_i32, %c0_i32_0 : i32, i32
  }
  func.func @transform_5(%arg0: i32, %arg1: i32) -> (i32, i32) {
    %c0_i32 = arith.constant 0 : i32
    %c0_i32_0 = arith.constant 0 : i32
    %c0_i32_1 = arith.constant 0 : i32
    return %c0_i32, %c0_i32_0 : i32, i32
  }
  func.func @transform_6(%arg0: i32, %arg1: i32) -> (i32, i32, i32, i32) {
    %c0_i32 = arith.constant 0 : i32
    %c0_i32_0 = arith.constant 0 : i32
    %c0_i32_1 = arith.constant 0 : i32
    return %arg0, %arg1, %c0_i32, %c0_i32_0 : i32, i32, i32, i32
  }
}

</mosaic_0001>

<llo_original>
// kernel: fcn_head_forward.1
$region0: #{fcn_head_forward.1}
  #allocation0 [shape = 'u32[]', space=smem, size = 0x4, offset = 0x4, fixed_abs, tag = 'smem constant byte address 0x4 - core index']
  #allocation1 [shape = 'u32[72,128]{1,0:T(1,128)}', space=vmem, size = 0x9000, scoped, tag = 'internal scratch']
  %s0 = inlined_call_operand.vmem [shape: bf16[2,2,240,16], index: 0, kind: input, shape index: {}]
  %s1 = inlined_call_operand.vmem [shape: bf16[9,16,128], index: 1, kind: input, shape index: {}]
  %s2 = inlined_call_operand.vmem [shape: f32[1,128], index: 2, kind: input, shape index: {}]
  %s3 = inlined_call_operand.vmem [shape: f32[1,128], index: 3, kind: input, shape index: {}]
  %s4 = inlined_call_operand.vmem [shape: bf16[128,128], index: 4, kind: input, shape index: {}]
  %s5 = inlined_call_operand.vmem [shape: f32[1,128], index: 5, kind: input, shape index: {}]
  %s6 = inlined_call_operand.vmem [shape: f32[2,2,192,128], index: 6, kind: output, shape index: {}]
  %s7 = sld [smem:[#allocation0]]
  $region57: #{fcn_head_forward.1} parent=0
    _
  %s9 = ssub.s32 1, %s7
  %s10 = scalar_select 0, %s9, %s7
  loop: start=0, step=1, limit=6
  $region2: #{fcn_head_forward.1} parent=0 // loop_pre_header
    _
  $region3: #{fcn_head_forward.1} parent=0 // loop_header
    %s12 = sphi 0, %s16
    %p13 = scmp.ge.s32.totalorder %s12, 6
    %s19 = sphi 0, %s31
    %s20 = sphi 0, %s27
    %s21 = sphi 0, %s19
    %s22 = sphi 0, %s20
    %s23 = sphi 0, %s21
    %s24 = sphi 0, %s22
    %s36 = sphi 0, %s38
    %s39 = sphi 0, %s36
    %s40 = sphi 0, %s39
    %s56 = sphi 0, %s40
    %s60 = sphi 0, %s60
    %s62 = sphi 0, %s60
    %s63 = sphi 0, %s62
    %s77 = sphi 0, %s63
    %s81 = sphi 0, %s81
    %s83 = sphi 0, %s81
    %s84 = sphi 0, %s83
    %s98 = sphi 0, %s84
    %s102 = sphi 0, %s102
    %s104 = sphi 0, %s102
    %s105 = sphi 0, %s104
    %s119 = sphi 0, %s105
    %s123 = sphi 0, %s123
    %s125 = sphi 0, %s123
    %s126 = sphi 0, %s125
    %s140 = sphi 0, %s126
    %s144 = sphi 0, %s144
    %s146 = sphi 0, %s144
    %s147 = sphi 0, %s146
    %s161 = sphi 0, %s147
    %s169 = sphi 0, %s171
    %s172 = sphi 0, %s169
    %s173 = sphi 0, %s172
    %s189 = sphi 0, %s173
  $region4: #{fcn_head_forward.1} parent=0 // loop_header_branch
    %15 = sbr.rel (%p13) target = $region8
  $region5: #{fcn_head_forward.1} parent=0 // loop_body
    %s17 = ssub.s32 %s12, 1
    %s18 = ssub.s32 %s12, 2
    %s25 = sadd.s32 1, %s20
    %p26 = scmp.ge.s32.totalorder %s25, 2
    %s27 = scalar_select %p26, 0, %s25
    %s28 = sadd.s32 1, %s19
    %s29 = scalar_select %p26, %s28, %s19
    %p30 = scmp.ge.s32.totalorder %s29, 2
    %s31 = scalar_select %p30, 0, %s29
    %s32 = ssub.s32 %s19, %s31
    %s33 = ssub.s32 %s20, %s27
    %s34 = sor.u32 %s32, %s33
    %p35 = scmp.eq.s32.totalorder %s34, 0
    %s37 = sadd.s32 %s36, 1
    %s38 = scalar_select %p35, %s36, %s37
    %p41 = pneg %p35
    %p42 = scmp.eq.s32.totalorder %s12, 3
    %p43 = por %p41, %p42
    %p44 = scmp.ne.s32.totalorder %s36, %s39
    %p45 = scmp.eq.s32.totalorder %s12, 0
    %p46 = por %p44, %p45
    %p47 = scmp.ne.s32.totalorder %s36, %s39
    %p48 = scmp.eq.s32.totalorder %s17, 3
    %p49 = por %p47, %p48
    %p50 = scmp.ne.s32.totalorder %s39, %s40
    %p51 = scmp.eq.s32.totalorder %s17, 0
    %p52 = por %p50, %p51
    %p53 = scmp.ne.s32.totalorder %s39, %s40
    %p54 = scmp.eq.s32.totalorder %s18, 3
    %p55 = por %p53, %p54
    %p57 = scmp.ne.s32.totalorder %s40, %s56
    %p58 = scmp.eq.s32.totalorder %s18, 0
    %p59 = por %p57, %p58
    %s61 = sadd.s32 %s60, 1
    %p64 = scmp.eq.s32.totalorder %s12, 3
    %p65 = scmp.ne.s32.totalorder %s60, %s62
    %p66 = scmp.eq.s32.totalorder %s12, 0
    %p67 = por %p65, %p66
    %p68 = scmp.ne.s32.totalorder %s60, %s62
    %p69 = scmp.eq.s32.totalorder %s17, 3
    %p70 = por %p68, %p69
    %p71 = scmp.ne.s32.totalorder %s62, %s63
    %p72 = scmp.eq.s32.totalorder %s17, 0
    %p73 = por %p71, %p72
    %p74 = scmp.ne.s32.totalorder %s62, %s63
    %p75 = scmp.eq.s32.totalorder %s18, 3
    %p76 = por %p74, %p75
    %p78 = scmp.ne.s32.totalorder %s63, %s77
    %p79 = scmp.eq.s32.totalorder %s18, 0
    %p80 = por %p78, %p79
    %s82 = sadd.s32 %s81, 1
    %p85 = scmp.eq.s32.totalorder %s12, 3
    %p86 = scmp.ne.s32.totalorder %s81, %s83
    %p87 = scmp.eq.s32.totalorder %s12, 0
    %p88 = por %p86, %p87
    %p89 = scmp.ne.s32.totalorder %s81, %s83
    %p90 = scmp.eq.s32.totalorder %s17, 3
    %p91 = por %p89, %p90
    %p92 = scmp.ne.s32.totalorder %s83, %s84
    %p93 = scmp.eq.s32.totalorder %s17, 0
    %p94 = por %p92, %p93
    %p95 = scmp.ne.s32.totalorder %s83, %s84
    %p96 = scmp.eq.s32.totalorder %s18, 3
    %p97 = por %p95, %p96
    %p99 = scmp.ne.s32.totalorder %s84, %s98
    %p100 = scmp.eq.s32.totalorder %s18, 0
    %p101 = por %p99, %p100
    %s103 = sadd.s32 %s102, 1
    %p106 = scmp.eq.s32.totalorder %s12, 3
    %p107 = scmp.ne.s32.totalorder %s102, %s104
    %p108 = scmp.eq.s32.totalorder %s12, 0
    %p109 = por %p107, %p108
    %p110 = scmp.ne.s32.totalorder %s102, %s104
    %p111 = scmp.eq.s32.totalorder %s17, 3
    %p112 = por %p110, %p111
    %p113 = scmp.ne.s32.totalorder %s104, %s105
    %p114 = scmp.eq.s32.totalorder %s17, 0
    %p115 = por %p113, %p114
    %p116 = scmp.ne.s32.totalorder %s104, %s105
    %p117 = scmp.eq.s32.totalorder %s18, 3
    %p118 = por %p116, %p117
    %p120 = scmp.ne.s32.totalorder %s105, %s119
    %p121 = scmp.eq.s32.totalorder %s18, 0
    %p122 = por %p120, %p121
    %s124 = sadd.s32 %s123, 1
    %p127 = scmp.eq.s32.totalorder %s12, 3
    %p128 = scmp.ne.s32.totalorder %s123, %s125
    %p129 = scmp.eq.s32.totalorder %s12, 0
    %p130 = por %p128, %p129
    %p131 = scmp.ne.s32.totalorder %s123, %s125
    %p132 = scmp.eq.s32.totalorder %s17, 3
    %p133 = por %p131, %p132
    %p134 = scmp.ne.s32.totalorder %s125, %s126
    %p135 = scmp.eq.s32.totalorder %s17, 0
    %p136 = por %p134, %p135
    %p137 = scmp.ne.s32.totalorder %s125, %s126
    %p138 = scmp.eq.s32.totalorder %s18, 3
    %p139 = por %p137, %p138
    %p141 = scmp.ne.s32.totalorder %s126, %s140
    %p142 = scmp.eq.s32.totalorder %s18, 0
    %p143 = por %p141, %p142
    %s145 = sadd.s32 %s144, 1
    %p148 = scmp.eq.s32.totalorder %s12, 3
    %p149 = scmp.ne.s32.totalorder %s144, %s146
    %p150 = scmp.eq.s32.totalorder %s12, 0
    %p151 = por %p149, %p150
    %p152 = scmp.ne.s32.totalorder %s144, %s146
    %p153 = scmp.eq.s32.totalorder %s17, 3
    %p154 = por %p152, %p153
    %p155 = scmp.ne.s32.totalorder %s146, %s147
    %p156 = scmp.eq.s32.totalorder %s17, 0
    %p157 = por %p155, %p156
    %p158 = scmp.ne.s32.totalorder %s146, %s147
    %p159 = scmp.eq.s32.totalorder %s18, 3
    %p160 = por %p158, %p159
    %p162 = scmp.ne.s32.totalorder %s147, %s161
    %p163 = scmp.eq.s32.totalorder %s18, 0
    %p164 = por %p162, %p163
    %s165 = ssub.s32 %s19, %s31
    %s166 = ssub.s32 %s20, %s27
    %s167 = sor.u32 %s165, %s166
    %p168 = scmp.eq.s32.totalorder %s167, 0
    %s170 = sadd.s32 %s169, 1
    %s171 = scalar_select %p168, %s169, %s170
    %p174 = pneg %p168
    %p175 = scmp.eq.s32.totalorder %s12, 3
    %p176 = por %p174, %p175
    %p177 = scmp.ne.s32.totalorder %s169, %s172
    %p178 = scmp.eq.s32.totalorder %s12, 0
    %p179 = por %p177, %p178
    %p180 = scmp.ne.s32.totalorder %s169, %s172
    %p181 = scmp.eq.s32.totalorder %s17, 3
    %p182 = por %p180, %p181
    %p183 = scmp.ne.s32.totalorder %s172, %s173
    %p184 = scmp.eq.s32.totalorder %s17, 0
    %p185 = por %p183, %p184
    %p186 = scmp.ne.s32.totalorder %s172, %s173
    %p187 = scmp.eq.s32.totalorder %s18, 3
    %p188 = por %p186, %p187
    %p190 = scmp.ne.s32.totalorder %s173, %s189
    %p191 = scmp.eq.s32.totalorder %s18, 0
    %p192 = por %p190, %p191
    %p193 = scmp.le.s32.totalorder 1, %s12
    %p194 = scmp.lt.s32.totalorder %s12, 5
    %p195 = pnand %p193, %p194
    %p196 = pneg %p195
    // Predicated region
    $region9: #{fcn_head_forward.1} parent=5 // pred_check
      _
    $region10: #{fcn_head_forward.1} parent=5 // pred_check_branch
      %198 = sbr.rel (%p195) target = $region12
    $region11: #{fcn_head_forward.1} parent=5 // pred_region
      %s199 = ssub.s32 %s12, 1
      // Predicated region
      $region13: #{fcn_head_forward.1} parent=11 // pred_check
        %p200 = pneg %p73
      $region14: #{fcn_head_forward.1} parent=11 // pred_check_branch
        %202 = sbr.rel (%p200) target = $region16
      $region15: #{fcn_head_forward.1} parent=11 // pred_region
        _
      $region16: #{fcn_head_forward.1} parent=11 // pred_fallthru
        _
      // Predicated region
      $region17: #{fcn_head_forward.1} parent=11 // pred_check
        %p203 = pneg %p94
      $region18: #{fcn_head_forward.1} parent=11 // pred_check_branch
        %205 = sbr.rel (%p203) target = $region20
      $region19: #{fcn_head_forward.1} parent=11 // pred_region
        _
      $region20: #{fcn_head_forward.1} parent=11 // pred_fallthru
        _
      // Predicated region
      $region21: #{fcn_head_forward.1} parent=11 // pred_check
        %p206 = pneg %p115
      $region22: #{fcn_head_forward.1} parent=11 // pred_check_branch
        %208 = sbr.rel (%p206) target = $region24
      $region23: #{fcn_head_forward.1} parent=11 // pred_region
        _
      $region24: #{fcn_head_forward.1} parent=11 // pred_fallthru
        _
      // Predicated region
      $region25: #{fcn_head_forward.1} parent=11 // pred_check
        %p209 = pneg %p136
      $region26: #{fcn_head_forward.1} parent=11 // pred_check_branch
        %211 = sbr.rel (%p209) target = $region28
      $region27: #{fcn_head_forward.1} parent=11 // pred_region
        _
      $region28: #{fcn_head_forward.1} parent=11 // pred_fallthru
        _
      // Predicated region
      $region29: #{fcn_head_forward.1} parent=11 // pred_check
        %p212 = pneg %p157
      $region30: #{fcn_head_forward.1} parent=11 // pred_check_branch
        %214 = sbr.rel (%p212) target = $region32
      $region31: #{fcn_head_forward.1} parent=11 // pred_region
        _
      $region32: #{fcn_head_forward.1} parent=11 // pred_fallthru
        _
    $region12: #{fcn_head_forward.1} parent=5 // pred_fallthru
      _
    %p215 = scmp.lt.s32.totalorder %s12, 4
    // Predicated region
    $region33: #{fcn_head_forward.1} parent=5 // pred_check
      %p216 = pneg %p215
    $region34: #{fcn_head_forward.1} parent=5 // pred_check_branch
      %218 = sbr.rel (%p216) target = $region36
    $region35: #{fcn_head_forward.1} parent=5 // pred_region
      // Predicated region
      $region37: #{fcn_head_forward.1} parent=35 // pred_check
        %p219 = pneg %p46
      $region38: #{fcn_head_forward.1} parent=35 // pred_check_branch
        %221 = sbr.rel (%p219) target = $region40
      $region39: #{fcn_head_forward.1} parent=35 // pred_region
        %p222 = scmp.lt.s32.totalorder %s19, 1
        %s223 = scalar_select %p222, %s19, 1
        %p224 = scmp.lt.s32.totalorder %s20, 1
        %s225 = scalar_select %p224, %s20, 1
        %s226 = smul.addr %s225, 30
        %s227 = smul.addr %s223, 60
        %s228 = sadd.s32 %s226, %s227
        %s229 = smul.addr %s228, 4
        %s230 = scalar_lea.vmem %s0, %s229
      $region40: #{fcn_head_forward.1} parent=35 // pred_fallthru
        _
    $region36: #{fcn_head_forward.1} parent=5 // pred_fallthru
      _
    %p231 = scmp.le.s32.totalorder 1, %s12
    %p232 = scmp.lt.s32.totalorder %s12, 5
    %p233 = pnand %p231, %p232
    %p234 = pneg %p233
    // Predicated region
    $region41: #{fcn_head_forward.1} parent=5 // pred_check
      _
    $region42: #{fcn_head_forward.1} parent=5 // pred_check_branch
      %236 = sbr.rel (%p233) target = $region44
    $region43: #{fcn_head_forward.1} parent=5 // pred_region
      %s237 = ssub.s32 %s12, 1
      %p238 = scmp.lt.s32.totalorder %s21, 1
      %s239 = scalar_select %p238, %s21, 1
      %p240 = scmp.lt.s32.totalorder %s22, 1
      %s241 = scalar_select %p240, %s22, 1
      %s242 = smul.addr %s241, 30
      %s243 = smul.addr %s239, 60
      %s244 = sadd.s32 %s242, %s243
      %s245 = smul.addr %s244, 4
      %s246 = scalar_lea.vmem %s0, %s245
      %p247 = pneg %p52
      %p248 = pneg %p49
      %p249 = pneg %p73
      %p250 = pneg %p70
      %p251 = pneg %p94
      %p252 = pneg %p91
      %p253 = pneg %p115
      %p254 = pneg %p112
      %p255 = pneg %p136
      %p256 = pneg %p133
      %p257 = pneg %p157
      %p258 = pneg %p154
      %p259 = pneg %p185
      %p260 = pneg %p182
      %p261 = scmp.lt.s32.totalorder %s21, 1
      %s262 = scalar_select %p261, %s21, 1
      %p263 = scmp.lt.s32.totalorder %s22, 1
      %s264 = scalar_select %p263, %s22, 1
      %s265 = smul.addr %s264, 24
      %s266 = smul.addr %s262, 48
      %s267 = sadd.s32 %s265, %s266
      %s268 = smul.addr %s267, 8
      %s269 = scalar_lea.vmem %s6, %s268
      %p270 = scmp.lt.s32.totalorder %s21, 1
      %s271 = scalar_select %p270, %s21, 1
      %p272 = scmp.lt.s32.totalorder %s22, 1
      %s273 = scalar_select %p272, %s22, 1
      %s274 = smul.addr %s273, 30
      %s275 = smul.addr %s271, 60
      %s276 = sadd.s32 %s274, %s275
      %s277 = smul.addr %s276, 4
      %s278 = scalar_lea.vmem %s0, %s277
      %p279 = scmp.lt.s32.totalorder %s21, 1
      %s280 = scalar_select %p279, %s21, 1
      %p281 = scmp.lt.s32.totalorder %s22, 1
      %s282 = scalar_select %p281, %s22, 1
      %s283 = smul.addr %s282, 24
      %s284 = smul.addr %s280, 48
      %s285 = sadd.s32 %s283, %s284
      %s286 = smul.addr %s285, 8
      %s287 = scalar_lea.vmem %s6, %s286
      %v289 = vld [vmem:[%s278] sm:$0xf]
      %v290 = vld [vmem:[%s278 + $0x4] sm:$0xf]
      %v291 = vld [vmem:[%s278 + $0x8] sm:$0xf]
      %v292 = vld [vmem:[%s278 + $0xc] sm:$0xf]
      %v293 = vld [vmem:[%s278 + $0x10] sm:$0xf]
      %v294 = vld [vmem:[%s278 + $0x14] sm:$0xf]
      %v295 = vld [vmem:[%s278 + $0x18] sm:$0xf]
      %v296 = vld [vmem:[%s278 + $0x1c] sm:$0xf]
      %v297 = vld [vmem:[%s278 + $0x20] sm:$0xf]
      %v298 = vld [vmem:[%s278 + $0x24] sm:$0xf]
      %v299 = vld [vmem:[%s278 + $0x28] sm:$0xf]
      %v300 = vld [vmem:[%s278 + $0x2c] sm:$0xf]
      %v301 = vld [vmem:[%s278 + $0x30] sm:$0xf]
      %v302 = vld [vmem:[%s278 + $0x34] sm:$0xf]
      %v303 = vld [vmem:[%s278 + $0x38] sm:$0xf]
      %v304 = vld [vmem:[%s278 + $0x3c] sm:$0xf]
      %v305 = vld [vmem:[%s278 + $0x40] sm:$0xf]
      %v306 = vld [vmem:[%s278 + $0x44] sm:$0xf]
      %v307 = vld [vmem:[%s278 + $0x48] sm:$0xf]
      %v308 = vld [vmem:[%s278 + $0x4c] sm:$0xf]
      %v309 = vld [vmem:[%s278 + $0x50] sm:$0xf]
      %v310 = vld [vmem:[%s278 + $0x54] sm:$0xf]
      %v311 = vld [vmem:[%s278 + $0x58] sm:$0xf]
      %v312 = vld [vmem:[%s278 + $0x5c] sm:$0xf]
      %v313 = vld [vmem:[%s278 + $0x60] sm:$0xf]
      %v314 = vld [vmem:[%s278 + $0x64] sm:$0xf]
      %v315 = vld [vmem:[%s278 + $0x68] sm:$0xf]
      %v316 = vld [vmem:[%s278 + $0x6c] sm:$0xf]
      %v317 = vld [vmem:[%s278 + $0x70] sm:$0xf]
      %v318 = vld [vmem:[%s278 + $0x74] sm:$0xf]
      %v319 = vld [vmem:[%s1] sm:$0xf]
      %v320 = vld [vmem:[%s1 + $0x4] sm:$0xf]
      %s321 = scalar_lea.vmem %s1, 8
      %v322 = vld [vmem:[%s321] sm:$0xf]
      %v323 = vld [vmem:[%s321 + $0x4] sm:$0xf]
      %v354 = vunpack.c.l.b16 %v289
      %v355 = vunpack.c.l.b16 %v290
      %v356 = vunpack.c.l.b16 %v291
      %v357 = vunpack.c.l.b16 %v292
      %v358 = vunpack.c.l.b16 %v293
      %v359 = vunpack.c.l.b16 %v294
      %v360 = vunpack.c.l.b16 %v295
      %v361 = vunpack.c.l.b16 %v296
      %v362 = vunpack.c.l.b16 %v297
      %v363 = vunpack.c.l.b16 %v298
      %v364 = vunpack.c.l.b16 %v299
      %v365 = vunpack.c.l.b16 %v300
      %v366 = vunpack.c.l.b16 %v301
      %v367 = vunpack.c.l.b16 %v302
      %v368 = vunpack.c.l.b16 %v303
      %v369 = vunpack.c.l.b16 %v304
      %v370 = vunpack.c.l.b16 %v305
      %v371 = vunpack.c.l.b16 %v306
      %v372 = vunpack.c.l.b16 %v307
      %v373 = vunpack.c.l.b16 %v308
      %v374 = vunpack.c.l.b16 %v309
      %v375 = vunpack.c.l.b16 %v310
      %v376 = vunpack.c.l.b16 %v311
      %v377 = vunpack.c.l.b16 %v312
      %v378 = vunpack.c.l.b16 %v313
      %v379 = vunpack.c.l.b16 %v314
      %v380 = vunpack.c.l.b16 %v315
      %v381 = vunpack.c.l.b16 %v316
      %v382 = vunpack.c.l.b16 %v317
      %v383 = vunpack.c.l.b16 %v318
      %v384 = vpack.c.b16 %v355, %v354
      %v385 = vpack.c.b16 %v357, %v356
      %v386 = vpack.c.b16 %v359, %v358
      %v387 = vpack.c.b16 %v361, %v360
      %v388 = vpack.c.b16 %v363, %v362
      %v389 = vpack.c.b16 %v365, %v364
      %v390 = vpack.c.b16 %v367, %v366
      %v391 = vpack.c.b16 %v369, %v368
      %v392 = vpack.c.b16 %v371, %v370
      %v393 = vpack.c.b16 %v373, %v372
      %v394 = vpack.c.b16 %v375, %v374
      %v395 = vpack.c.b16 %v377, %v376
      %v396 = vpack.c.b16 %v379, %v378
      %v397 = vpack.c.b16 %v381, %v380
      %v398 = vpack.c.b16 %v383, %v382
      %v401 = vunpack.c.l.b16 %v322
      %v402 = vunpack.c.l.b16 %v323
      %v403 = vpack.c.b16 %v402, %v401
      %vm405 = vcmask 130048
      %v407 = vsel %vm405, %v384, 0
      %v410 = vsel %vm405, %v385, 0
      %v413 = vsel %vm405, %v386, 0
      %v416 = vsel %vm405, %v387, 0
      %v419 = vsel %vm405, %v388, 0
      %v422 = vsel %vm405, %v389, 0
      %v425 = vsel %vm405, %v390, 0
      %v428 = vsel %vm405, %v391, 0
      %v431 = vsel %vm405, %v392, 0
      %v434 = vsel %vm405, %v393, 0
      %v437 = vsel %vm405, %v394, 0
      %v440 = vsel %vm405, %v395, 0
      %v443 = vsel %vm405, %v396, 0
      %v446 = vsel %vm405, %v397, 0
      %v449 = vsel %vm405, %v398, 0
      %451 = vmatpush.bf16.msra.mxu0 0
      %452 = vmatpush.bf16.msra.mxu0 0
      %453 = vmatpush.bf16.msra.mxu0 0
      %454 = vmatpush.bf16.msra.mxu0 0
      %455 = vmatpush.bf16.msra.mxu0 0
      %456 = vmatpush.bf16.msra.mxu0 0
      %457 = vmatpush.bf16.msra.mxu0 0
      %458 = vmatpush.bf16.msra.mxu0 %v403
      %459 = vmatmul.bf16.gmra.mxu0 %v407
      %v460 = vpop.f32.mrf.mxu0
      %v461 = vadd.f32 0.0, %v460
      %v462 = vpop.f32.mrf.mxu0
      %v463 = vadd.f32 0.0, %v462
      %464 = vmatmul.bf16.gmra.mxu0 %v410
      %v465 = vpop.f32.mrf.mxu0
      %v466 = vadd.f32 0.0, %v465
      %v467 = vpop.f32.mrf.mxu0
      %v468 = vadd.f32 0.0, %v467
      %469 = vmatmul.bf16.gmra.mxu0 %v413
      %v470 = vpop.f32.mrf.mxu0
      %v471 = vadd.f32 0.0, %v470
      %v472 = vpop.f32.mrf.mxu0
      %v473 = vadd.f32 0.0, %v472
      %474 = vmatmul.bf16.gmra.mxu0 %v416
      %v475 = vpop.f32.mrf.mxu0
      %v476 = vadd.f32 0.0, %v475
      %v477 = vpop.f32.mrf.mxu0
      %v478 = vadd.f32 0.0, %v477
      %479 = vmatmul.bf16.gmra.mxu0 %v419
      %v480 = vpop.f32.mrf.mxu0
      %v481 = vadd.f32 0.0, %v480
      %v482 = vpop.f32.mrf.mxu0
      %v483 = vadd.f32 0.0, %v482
      %484 = vmatmul.bf16.gmra.mxu0 %v422
      %v485 = vpop.f32.mrf.mxu0
      %v486 = vadd.f32 0.0, %v485
      %v487 = vpop.f32.mrf.mxu0
      %v488 = vadd.f32 0.0, %v487
      %489 = vmatmul.bf16.gmra.mxu0 %v425
      %v490 = vpop.f32.mrf.mxu0
      %v491 = vadd.f32 0.0, %v490
      %v492 = vpop.f32.mrf.mxu0
      %v493 = vadd.f32 0.0, %v492
      %494 = vmatmul.bf16.gmra.mxu0 %v428
      %v495 = vpop.f32.mrf.mxu0
      %v496 = vadd.f32 0.0, %v495
      %v497 = vpop.f32.mrf.mxu0
      %v498 = vadd.f32 0.0, %v497
      %499 = vmatmul.bf16.gmra.mxu0 %v431
      %v500 = vpop.f32.mrf.mxu0
      %v501 = vadd.f32 0.0, %v500
      %v502 = vpop.f32.mrf.mxu0
      %v503 = vadd.f32 0.0, %v502
      %504 = vmatmul.bf16.gmra.mxu0 %v434
      %v505 = vpop.f32.mrf.mxu0
      %v506 = vadd.f32 0.0, %v505
      %v507 = vpop.f32.mrf.mxu0
      %v508 = vadd.f32 0.0, %v507
      %509 = vmatmul.bf16.gmra.mxu0 %v437
      %v510 = vpop.f32.mrf.mxu0
      %v511 = vadd.f32 0.0, %v510
      %v512 = vpop.f32.mrf.mxu0
      %v513 = vadd.f32 0.0, %v512
      %514 = vmatmul.bf16.gmra.mxu0 %v440
      %v515 = vpop.f32.mrf.mxu0
      %v516 = vadd.f32 0.0, %v515
      %v517 = vpop.f32.mrf.mxu0
      %v518 = vadd.f32 0.0, %v517
      %519 = vmatmul.bf16.gmra.mxu0 %v443
      %v520 = vpop.f32.mrf.mxu0
      %v521 = vadd.f32 0.0, %v520
      %v522 = vpop.f32.mrf.mxu0
      %523 = vmatmul.bf16.gmra.mxu0 %v446
      %v524 = vpop.f32.mrf.mxu0
      %v525 = vpop.f32.mrf.mxu0
      %526 = vmatmul.bf16.gmra.mxu0 %v449
      %v527 = vpop.f32.mrf.mxu0
      %v528 = vpop.f32.mrf.mxu0
      %529 = vdwg.mxu0
      %v530 = vrot.slane %v461, 1
      %v531 = vrot.slane %v463, 1
      %v532 = vrot.slane %v466, 1
      %v533 = vrot.slane %v468, 1
      %v534 = vrot.slane %v471, 1
      %v535 = vrot.slane %v473, 1
      %v536 = vrot.slane %v476, 1
      %v537 = vrot.slane %v478, 1
      %v538 = vrot.slane %v481, 1
      %v539 = vrot.slane %v483, 1
      %v540 = vrot.slane %v486, 1
      %v541 = vrot.slane %v488, 1
      %v542 = vrot.slane %v491, 1
      %v543 = vrot.slane %v493, 1
      %v544 = vrot.slane %v496, 1
      %v545 = vrot.slane %v498, 1
      %v546 = vrot.slane %v501, 1
      %v547 = vrot.slane %v503, 1
      %v548 = vrot.slane %v506, 1
      %v549 = vrot.slane %v508, 1
      %v550 = vrot.slane %v511, 1
      %v551 = vrot.slane %v513, 1
      %v552 = vrot.slane %v516, 1
      %v553 = vrot.slane %v518, 1
      %v554 = vrot.slane %v521, 1
      %v555 = vlaneseq
      %v556 = vshrl.u32 %v555, 7
      %vm557 = vcmp.lt.s32.totalorder %v556, 7
      %v558 = vsel %vm557, %v553, %v554
      %v559 = vsel %vm557, %v552, %v553
      %v560 = vsel %vm557, %v551, %v552
      %v561 = vsel %vm557, %v550, %v551
      %v562 = vsel %vm557, %v549, %v550
      %v563 = vsel %vm557, %v548, %v549
      %v564 = vsel %vm557, %v547, %v548
      %v565 = vsel %vm557, %v546, %v547
      %v566 = vsel %vm557, %v545, %v546
      %v567 = vsel %vm557, %v544, %v545
      %v568 = vsel %vm557, %v543, %v544
      %v569 = vsel %vm557, %v542, %v543
      %v570 = vsel %vm557, %v541, %v542
      %v571 = vsel %vm557, %v540, %v541
      %v572 = vsel %vm557, %v539, %v540
      %v573 = vsel %vm557, %v538, %v539
      %v574 = vsel %vm557, %v537, %v538
      %v575 = vsel %vm557, %v536, %v537
      %v576 = vsel %vm557, %v535, %v536
      %v577 = vsel %vm557, %v534, %v535
      %v578 = vsel %vm557, %v533, %v534
      %v579 = vsel %vm557, %v532, %v533
      %v580 = vsel %vm557, %v531, %v532
      %v581 = vsel %vm557, %v530, %v531
      %v584 = vunpack.c.l.b16 %v319
      %v585 = vunpack.c.l.b16 %v320
      %v586 = vpack.c.b16 %v585, %v584
      %588 = vmatpush.bf16.msra.mxu0 0
      %589 = vmatpush.bf16.msra.mxu0 0
      %590 = vmatpush.bf16.msra.mxu0 0
      %591 = vmatpush.bf16.msra.mxu0 0
      %592 = vmatpush.bf16.msra.mxu0 0
      %593 = vmatpush.bf16.msra.mxu0 0
      %594 = vmatpush.bf16.msra.mxu0 0
      %595 = vmatpush.bf16.msra.mxu0 %v586
      %596 = vmatmul.bf16.gmra.mxu0 %v407
      %v597 = vpop.f32.mrf.mxu0
      %v598 = vadd.f32 %v581, %v597
      %v599 = vpop.f32.mrf.mxu0
      %v600 = vadd.f32 %v580, %v599
      %601 = vmatmul.bf16.gmra.mxu0 %v410
      %v602 = vpop.f32.mrf.mxu0
      %v603 = vadd.f32 %v579, %v602
      %v604 = vpop.f32.mrf.mxu0
      %v605 = vadd.f32 %v578, %v604
      %606 = vmatmul.bf16.gmra.mxu0 %v413
      %v607 = vpop.f32.mrf.mxu0
      %v608 = vadd.f32 %v577, %v607
      %v609 = vpop.f32.mrf.mxu0
      %v610 = vadd.f32 %v576, %v609
      %611 = vmatmul.bf16.gmra.mxu0 %v416
      %v612 = vpop.f32.mrf.mxu0
      %v613 = vadd.f32 %v575, %v612
      %v614 = vpop.f32.mrf.mxu0
      %v615 = vadd.f32 %v574, %v614
      %616 = vmatmul.bf16.gmra.mxu0 %v419
      %v617 = vpop.f32.mrf.mxu0
      %v618 = vadd.f32 %v573, %v617
      %v619 = vpop.f32.mrf.mxu0
      %v620 = vadd.f32 %v572, %v619
      %621 = vmatmul.bf16.gmra.mxu0 %v422
      %v622 = vpop.f32.mrf.mxu0
      %v623 = vadd.f32 %v571, %v622
      %v624 = vpop.f32.mrf.mxu0
      %v625 = vadd.f32 %v570, %v624
      %626 = vmatmul.bf16.gmra.mxu0 %v425
      %v627 = vpop.f32.mrf.mxu0
      %v628 = vadd.f32 %v569, %v627
      %v629 = vpop.f32.mrf.mxu0
      %v630 = vadd.f32 %v568, %v629
      %631 = vmatmul.bf16.gmra.mxu0 %v428
      %v632 = vpop.f32.mrf.mxu0
      %v633 = vadd.f32 %v567, %v632
      %v634 = vpop.f32.mrf.mxu0
      %v635 = vadd.f32 %v566, %v634
      %636 = vmatmul.bf16.gmra.mxu0 %v431
      %v637 = vpop.f32.mrf.mxu0
      %v638 = vadd.f32 %v565, %v637
      %v639 = vpop.f32.mrf.mxu0
      %v640 = vadd.f32 %v564, %v639
      %641 = vmatmul.bf16.gmra.mxu0 %v434
      %v642 = vpop.f32.mrf.mxu0
      %v643 = vadd.f32 %v563, %v642
      %v644 = vpop.f32.mrf.mxu0
      %v645 = vadd.f32 %v562, %v644
      %646 = vmatmul.bf16.gmra.mxu0 %v437
      %v647 = vpop.f32.mrf.mxu0
      %v648 = vadd.f32 %v561, %v647
      %v649 = vpop.f32.mrf.mxu0
      %v650 = vadd.f32 %v560, %v649
      %651 = vmatmul.bf16.gmra.mxu0 %v440
      %v652 = vpop.f32.mrf.mxu0
      %v653 = vadd.f32 %v559, %v652
      %v654 = vpop.f32.mrf.mxu0
      %v655 = vadd.f32 %v558, %v654
      %656 = vmatmul.bf16.gmra.mxu0 %v443
      %v657 = vpop.f32.mrf.mxu0
      %v658 = vpop.f32.mrf.mxu0
      %659 = vmatmul.bf16.gmra.mxu0 %v446
      %v660 = vpop.f32.mrf.mxu0
      %v661 = vpop.f32.mrf.mxu0
      %662 = vmatmul.bf16.gmra.mxu0 %v449
      %v663 = vpop.f32.mrf.mxu0
      %v664 = vpop.f32.mrf.mxu0
      %665 = vdwg.mxu0
      %s666 = scalar_lea.vmem %s1, 16
      %v667 = vld [vmem:[%s666] sm:$0xf]
      %v668 = vld [vmem:[%s666 + $0x4] sm:$0xf]
      %v671 = vunpack.c.l.b16 %v667
      %v672 = vunpack.c.l.b16 %v668
      %v673 = vpack.c.b16 %v672, %v671
      %675 = vmatpush.bf16.msra.mxu0 0
      %676 = vmatpush.bf16.msra.mxu0 0
      %677 = vmatpush.bf16.msra.mxu0 0
      %678 = vmatpush.bf16.msra.mxu0 0
      %679 = vmatpush.bf16.msra.mxu0 0
      %680 = vmatpush.bf16.msra.mxu0 0
      %681 = vmatpush.bf16.msra.mxu0 0
      %682 = vmatpush.bf16.msra.mxu0 %v673
      %683 = vmatmul.bf16.gmra.mxu0 %v407
      %v684 = vpop.f32.mrf.mxu0
      %v685 = vadd.f32 0.0, %v684
      %v686 = vpop.f32.mrf.mxu0
      %v687 = vadd.f32 0.0, %v686
      %688 = vmatmul.bf16.gmra.mxu0 %v410
      %v689 = vpop.f32.mrf.mxu0
      %v690 = vadd.f32 0.0, %v689
      %v691 = vpop.f32.mrf.mxu0
      %v692 = vadd.f32 0.0, %v691
      %693 = vmatmul.bf16.gmra.mxu0 %v413
      %v694 = vpop.f32.mrf.mxu0
      %v695 = vadd.f32 0.0, %v694
      %v696 = vpop.f32.mrf.mxu0
      %v697 = vadd.f32 0.0, %v696
      %698 = vmatmul.bf16.gmra.mxu0 %v416
      %v699 = vpop.f32.mrf.mxu0
      %v700 = vadd.f32 0.0, %v699
      %v701 = vpop.f32.mrf.mxu0
      %v702 = vadd.f32 0.0, %v701
      %703 = vmatmul.bf16.gmra.mxu0 %v419
      %v704 = vpop.f32.mrf.mxu0
      %v705 = vadd.f32 0.0, %v704
      %v706 = vpop.f32.mrf.mxu0
      %v707 = vadd.f32 0.0, %v706
      %708 = vmatmul.bf16.gmra.mxu0 %v422
      %v709 = vpop.f32.mrf.mxu0
      %v710 = vadd.f32 0.0, %v709
      %v711 = vpop.f32.mrf.mxu0
      %v712 = vadd.f32 0.0, %v711
      %713 = vmatmul.bf16.gmra.mxu0 %v425
      %v714 = vpop.f32.mrf.mxu0
      %v715 = vadd.f32 0.0, %v714
      %v716 = vpop.f32.mrf.mxu0
      %v717 = vadd.f32 0.0, %v716
      %718 = vmatmul.bf16.gmra.mxu0 %v428
      %v719 = vpop.f32.mrf.mxu0
      %v720 = vadd.f32 0.0, %v719
      %v721 = vpop.f32.mrf.mxu0
      %v722 = vadd.f32 0.0, %v721
      %723 = vmatmul.bf16.gmra.mxu0 %v431
      %v724 = vpop.f32.mrf.mxu0
      %v725 = vadd.f32 0.0, %v724
      %v726 = vpop.f32.mrf.mxu0
      %v727 = vadd.f32 0.0, %v726
      %728 = vmatmul.bf16.gmra.mxu0 %v434
      %v729 = vpop.f32.mrf.mxu0
      %v730 = vadd.f32 0.0, %v729
      %v731 = vpop.f32.mrf.mxu0
      %v732 = vadd.f32 0.0, %v731
      %733 = vmatmul.bf16.gmra.mxu0 %v437
      %v734 = vpop.f32.mrf.mxu0
      %v735 = vadd.f32 0.0, %v734
      %v736 = vpop.f32.mrf.mxu0
      %v737 = vadd.f32 0.0, %v736
      %738 = vmatmul.bf16.gmra.mxu0 %v440
      %v739 = vpop.f32.mrf.mxu0
      %v740 = vadd.f32 0.0, %v739
      %v741 = vpop.f32.mrf.mxu0
      %v742 = vadd.f32 0.0, %v741
      %743 = vmatmul.bf16.gmra.mxu0 %v443
      %v744 = vpop.f32.mrf.mxu0
      %v745 = vadd.f32 0.0, %v744
      %v746 = vpop.f32.mrf.mxu0
      %747 = vmatmul.bf16.gmra.mxu0 %v446
      %v748 = vpop.f32.mrf.mxu0
      %v749 = vpop.f32.mrf.mxu0
      %750 = vmatmul.bf16.gmra.mxu0 %v449
      %v751 = vpop.f32.mrf.mxu0
      %v752 = vpop.f32.mrf.mxu0
      %753 = vdwg.mxu0
      %v754 = vrot.slane %v685, 2
      %v755 = vrot.slane %v687, 2
      %v756 = vrot.slane %v690, 2
      %v757 = vrot.slane %v692, 2
      %v758 = vrot.slane %v695, 2
      %v759 = vrot.slane %v697, 2
      %v760 = vrot.slane %v700, 2
      %v761 = vrot.slane %v702, 2
      %v762 = vrot.slane %v705, 2
      %v763 = vrot.slane %v707, 2
      %v764 = vrot.slane %v710, 2
      %v765 = vrot.slane %v712, 2
      %v766 = vrot.slane %v715, 2
      %v767 = vrot.slane %v717, 2
      %v768 = vrot.slane %v720, 2
      %v769 = vrot.slane %v722, 2
      %v770 = vrot.slane %v725, 2
      %v771 = vrot.slane %v727, 2
      %v772 = vrot.slane %v730, 2
      %v773 = vrot.slane %v732, 2
      %v774 = vrot.slane %v735, 2
      %v775 = vrot.slane %v737, 2
      %v776 = vrot.slane %v740, 2
      %v777 = vrot.slane %v742, 2
      %v778 = vrot.slane %v745, 2
      %vm779 = vcmp.lt.s32.totalorder %v556, 6
      %v780 = vsel %vm779, %v777, %v778
      %v781 = vsel %vm779, %v776, %v777
      %v782 = vsel %vm779, %v775, %v776
      %v783 = vsel %vm779, %v774, %v775
      %v784 = vsel %vm779, %v773, %v774
      %v785 = vsel %vm779, %v772, %v773
      %v786 = vsel %vm779, %v771, %v772
      %v787 = vsel %vm779, %v770, %v771
      %v788 = vsel %vm779, %v769, %v770
      %v789 = vsel %vm779, %v768, %v769
      %v790 = vsel %vm779, %v767, %v768
      %v791 = vsel %vm779, %v766, %v767
      %v792 = vsel %vm779, %v765, %v766
      %v793 = vsel %vm779, %v764, %v765
      %v794 = vsel %vm779, %v763, %v764
      %v795 = vsel %vm779, %v762, %v763
      %v796 = vsel %vm779, %v761, %v762
      %v797 = vsel %vm779, %v760, %v761
      %v798 = vsel %vm779, %v759, %v760
      %v799 = vsel %vm779, %v758, %v759
      %v800 = vsel %vm779, %v757, %v758
      %v801 = vsel %vm779, %v756, %v757
      %v802 = vsel %vm779, %v755, %v756
      %v803 = vsel %vm779, %v754, %v755
      %v804 = vadd.f32 %v598, %v803
      %v805 = vadd.f32 %v600, %v802
      %v806 = vadd.f32 %v603, %v801
      %v807 = vadd.f32 %v605, %v800
      %v808 = vadd.f32 %v608, %v799
      %v809 = vadd.f32 %v610, %v798
      %v810 = vadd.f32 %v613, %v797
      %v811 = vadd.f32 %v615, %v796
      %v812 = vadd.f32 %v618, %v795
      %v813 = vadd.f32 %v620, %v794
      %v814 = vadd.f32 %v623, %v793
      %v815 = vadd.f32 %v625, %v792
      %v816 = vadd.f32 %v628, %v791
      %v817 = vadd.f32 %v630, %v790
      %v818 = vadd.f32 %v633, %v789
      %v819 = vadd.f32 %v635, %v788
      %v820 = vadd.f32 %v638, %v787
      %v821 = vadd.f32 %v640, %v786
      %v822 = vadd.f32 %v643, %v785
      %v823 = vadd.f32 %v645, %v784
      %v824 = vadd.f32 %v648, %v783
      %v825 = vadd.f32 %v650, %v782
      %v826 = vadd.f32 %v653, %v781
      %v827 = vadd.f32 %v655, %v780
      %s828 = scalar_lea.vmem %s1, 24
      %v829 = vld [vmem:[%s828] sm:$0xf]
      %v830 = vld [vmem:[%s828 + $0x4] sm:$0xf]
      %v833 = vunpack.c.l.b16 %v829
      %v834 = vunpack.c.l.b16 %v830
      %v835 = vpack.c.b16 %v834, %v833
      %837 = vmatpush.bf16.msra.mxu0 0
      %838 = vmatpush.bf16.msra.mxu0 0
      %839 = vmatpush.bf16.msra.mxu0 0
      %840 = vmatpush.bf16.msra.mxu0 0
      %841 = vmatpush.bf16.msra.mxu0 0
      %842 = vmatpush.bf16.msra.mxu0 0
      %843 = vmatpush.bf16.msra.mxu0 0
      %844 = vmatpush.bf16.msra.mxu0 %v835
      %845 = vmatmul.bf16.gmra.mxu0 %v407
      %v846 = vpop.f32.mrf.mxu0
      %v847 = vpop.f32.mrf.mxu0
      %848 = vmatmul.bf16.gmra.mxu0 %v410
      %v849 = vpop.f32.mrf.mxu0
      %v850 = vpop.f32.mrf.mxu0
      %v851 = vadd.f32 0.0, %v850
      %852 = vmatmul.bf16.gmra.mxu0 %v413
      %v853 = vpop.f32.mrf.mxu0
      %v854 = vadd.f32 0.0, %v853
      %v855 = vpop.f32.mrf.mxu0
      %v856 = vadd.f32 0.0, %v855
      %857 = vmatmul.bf16.gmra.mxu0 %v416
      %v858 = vpop.f32.mrf.mxu0
      %v859 = vadd.f32 0.0, %v858
      %v860 = vpop.f32.mrf.mxu0
      %v861 = vadd.f32 0.0, %v860
      %862 = vmatmul.bf16.gmra.mxu0 %v419
      %v863 = vpop.f32.mrf.mxu0
      %v864 = vadd.f32 0.0, %v863
      %v865 = vpop.f32.mrf.mxu0
      %v866 = vadd.f32 0.0, %v865
      %867 = vmatmul.bf16.gmra.mxu0 %v422
      %v868 = vpop.f32.mrf.mxu0
      %v869 = vadd.f32 0.0, %v868
      %v870 = vpop.f32.mrf.mxu0
      %v871 = vadd.f32 0.0, %v870
      %872 = vmatmul.bf16.gmra.mxu0 %v425
      %v873 = vpop.f32.mrf.mxu0
      %v874 = vadd.f32 0.0, %v873
      %v875 = vpop.f32.mrf.mxu0
      %v876 = vadd.f32 0.0, %v875
      %877 = vmatmul.bf16.gmra.mxu0 %v428
      %v878 = vpop.f32.mrf.mxu0
      %v879 = vadd.f32 0.0, %v878
      %v880 = vpop.f32.mrf.mxu0
      %v881 = vadd.f32 0.0, %v880
      %882 = vmatmul.bf16.gmra.mxu0 %v431
      %v883 = vpop.f32.mrf.mxu0
      %v884 = vadd.f32 0.0, %v883
      %v885 = vpop.f32.mrf.mxu0
      %v886 = vadd.f32 0.0, %v885
      %887 = vmatmul.bf16.gmra.mxu0 %v434
      %v888 = vpop.f32.mrf.mxu0
      %v889 = vadd.f32 0.0, %v888
      %v890 = vpop.f32.mrf.mxu0
      %v891 = vadd.f32 0.0, %v890
      %892 = vmatmul.bf16.gmra.mxu0 %v437
      %v893 = vpop.f32.mrf.mxu0
      %v894 = vadd.f32 0.0, %v893
      %v895 = vpop.f32.mrf.mxu0
      %v896 = vadd.f32 0.0, %v895
      %897 = vmatmul.bf16.gmra.mxu0 %v440
      %v898 = vpop.f32.mrf.mxu0
      %v899 = vadd.f32 0.0, %v898
      %v900 = vpop.f32.mrf.mxu0
      %v901 = vadd.f32 0.0, %v900
      %902 = vmatmul.bf16.gmra.mxu0 %v443
      %v903 = vpop.f32.mrf.mxu0
      %v904 = vadd.f32 0.0, %v903
      %v905 = vpop.f32.mrf.mxu0
      %v906 = vadd.f32 0.0, %v905
      %907 = vmatmul.bf16.gmra.mxu0 %v446
      %v908 = vpop.f32.mrf.mxu0
      %v909 = vadd.f32 0.0, %v908
      %v910 = vpop.f32.mrf.mxu0
      %911 = vmatmul.bf16.gmra.mxu0 %v449
      %v912 = vpop.f32.mrf.mxu0
      %v913 = vpop.f32.mrf.mxu0
      %914 = vdwg.mxu0
      %v915 = vadd.f32 %v804, %v851
      %v916 = vadd.f32 %v805, %v854
      %v917 = vadd.f32 %v806, %v856
      %v918 = vadd.f32 %v807, %v859
      %v919 = vadd.f32 %v808, %v861
      %v920 = vadd.f32 %v809, %v864
      %v921 = vadd.f32 %v810, %v866
      %v922 = vadd.f32 %v811, %v869
      %v923 = vadd.f32 %v812, %v871
      %v924 = vadd.f32 %v813, %v874
      %v925 = vadd.f32 %v814, %v876
      %v926 = vadd.f32 %v815, %v879
      %v927 = vadd.f32 %v816, %v881
      %v928 = vadd.f32 %v817, %v884
      %v929 = vadd.f32 %v818, %v886
      %v930 = vadd.f32 %v819, %v889
      %v931 = vadd.f32 %v820, %v891
      %v932 = vadd.f32 %v821, %v894
      %v933 = vadd.f32 %v822, %v896
      %v934 = vadd.f32 %v823, %v899
      %v935 = vadd.f32 %v824, %v901
      %v936 = vadd.f32 %v825, %v904
      %v937 = vadd.f32 %v826, %v906
      %v938 = vadd.f32 %v827, %v909
      %s939 = scalar_lea.vmem %s1, 32
      %v940 = vld [vmem:[%s939] sm:$0xf]
      %v941 = vld [vmem:[%s939 + $0x4] sm:$0xf]
      %v944 = vunpack.c.l.b16 %v940
      %v945 = vunpack.c.l.b16 %v941
      %v946 = vpack.c.b16 %v945, %v944
      %948 = vmatpush.bf16.msra.mxu0 0
      %949 = vmatpush.bf16.msra.mxu0 0
      %950 = vmatpush.bf16.msra.mxu0 0
      %951 = vmatpush.bf16.msra.mxu0 0
      %952 = vmatpush.bf16.msra.mxu0 0
      %953 = vmatpush.bf16.msra.mxu0 0
      %954 = vmatpush.bf16.msra.mxu0 0
      %955 = vmatpush.bf16.msra.mxu0 %v946
      %956 = vmatmul.bf16.gmra.mxu0 %v407
      %v957 = vpop.f32.mrf.mxu0
      %v958 = vpop.f32.mrf.mxu0
      %959 = vmatmul.bf16.gmra.mxu0 %v410
      %v960 = vpop.f32.mrf.mxu0
      %v961 = vpop.f32.mrf.mxu0
      %v962 = vadd.f32 0.0, %v961
      %963 = vmatmul.bf16.gmra.mxu0 %v413
      %v964 = vpop.f32.mrf.mxu0
      %v965 = vadd.f32 0.0, %v964
      %v966 = vpop.f32.mrf.mxu0
      %v967 = vadd.f32 0.0, %v966
      %968 = vmatmul.bf16.gmra.mxu0 %v416
      %v969 = vpop.f32.mrf.mxu0
      %v970 = vadd.f32 0.0, %v969
      %v971 = vpop.f32.mrf.mxu0
      %v972 = vadd.f32 0.0, %v971
      %973 = vmatmul.bf16.gmra.mxu0 %v419
      %v974 = vpop.f32.mrf.mxu0
      %v975 = vadd.f32 0.0, %v974
      %v976 = vpop.f32.mrf.mxu0
      %v977 = vadd.f32 0.0, %v976
      %978 = vmatmul.bf16.gmra.mxu0 %v422
      %v979 = vpop.f32.mrf.mxu0
      %v980 = vadd.f32 0.0, %v979
      %v981 = vpop.f32.mrf.mxu0
      %v982 = vadd.f32 0.0, %v981
      %983 = vmatmul.bf16.gmra.mxu0 %v425
      %v984 = vpop.f32.mrf.mxu0
      %v985 = vadd.f32 0.0, %v984
      %v986 = vpop.f32.mrf.mxu0
      %v987 = vadd.f32 0.0, %v986
      %988 = vmatmul.bf16.gmra.mxu0 %v428
      %v989 = vpop.f32.mrf.mxu0
      %v990 = vadd.f32 0.0, %v989
      %v991 = vpop.f32.mrf.mxu0
      %v992 = vadd.f32 0.0, %v991
      %993 = vmatmul.bf16.gmra.mxu0 %v431
      %v994 = vpop.f32.mrf.mxu0
      %v995 = vadd.f32 0.0, %v994
      %v996 = vpop.f32.mrf.mxu0
      %v997 = vadd.f32 0.0, %v996
      %998 = vmatmul.bf16.gmra.mxu0 %v434
      %v999 = vpop.f32.mrf.mxu0
      %v1000 = vadd.f32 0.0, %v999
      %v1001 = vpop.f32.mrf.mxu0
      %v1002 = vadd.f32 0.0, %v1001
      %1003 = vmatmul.bf16.gmra.mxu0 %v437
      %v1004 = vpop.f32.mrf.mxu0
      %v1005 = vadd.f32 0.0, %v1004
      %v1006 = vpop.f32.mrf.mxu0
      %v1007 = vadd.f32 0.0, %v1006
      %1008 = vmatmul.bf16.gmra.mxu0 %v440
      %v1009 = vpop.f32.mrf.mxu0
      %v1010 = vadd.f32 0.0, %v1009
      %v1011 = vpop.f32.mrf.mxu0
      %v1012 = vadd.f32 0.0, %v1011
      %1013 = vmatmul.bf16.gmra.mxu0 %v443
      %v1014 = vpop.f32.mrf.mxu0
      %v1015 = vadd.f32 0.0, %v1014
      %v1016 = vpop.f32.mrf.mxu0
      %v1017 = vadd.f32 0.0, %v1016
      %1018 = vmatmul.bf16.gmra.mxu0 %v446
      %v1019 = vpop.f32.mrf.mxu0
      %v1020 = vadd.f32 0.0, %v1019
      %v1021 = vpop.f32.mrf.mxu0
      %v1022 = vadd.f32 0.0, %v1021
      %1023 = vmatmul.bf16.gmra.mxu0 %v449
      %v1024 = vpop.f32.mrf.mxu0
      %v1025 = vpop.f32.mrf.mxu0
      %1026 = vdwg.mxu0
      %v1027 = vrot.slane %v962, 1
      %v1028 = vrot.slane %v965, 1
      %v1029 = vrot.slane %v967, 1
      %v1030 = vrot.slane %v970, 1
      %v1031 = vrot.slane %v972, 1
      %v1032 = vrot.slane %v975, 1
      %v1033 = vrot.slane %v977, 1
      %v1034 = vrot.slane %v980, 1
      %v1035 = vrot.slane %v982, 1
      %v1036 = vrot.slane %v985, 1
      %v1037 = vrot.slane %v987, 1
      %v1038 = vrot.slane %v990, 1
      %v1039 = vrot.slane %v992, 1
      %v1040 = vrot.slane %v995, 1
      %v1041 = vrot.slane %v997, 1
      %v1042 = vrot.slane %v1000, 1
      %v1043 = vrot.slane %v1002, 1
      %v1044 = vrot.slane %v1005, 1
      %v1045 = vrot.slane %v1007, 1
      %v1046 = vrot.slane %v1010, 1
      %v1047 = vrot.slane %v1012, 1
      %v1048 = vrot.slane %v1015, 1
      %v1049 = vrot.slane %v1017, 1
      %v1050 = vrot.slane %v1020, 1
      %v1051 = vrot.slane %v1022, 1
      %v1052 = vsel %vm557, %v1050, %v1051
      %v1053 = vsel %vm557, %v1049, %v1050
      %v1054 = vsel %vm557, %v1048, %v1049
      %v1055 = vsel %vm557, %v1047, %v1048
      %v1056 = vsel %vm557, %v1046, %v1047
      %v1057 = vsel %vm557, %v1045, %v1046
      %v1058 = vsel %vm557, %v1044, %v1045
      %v1059 = vsel %vm557, %v1043, %v1044
      %v1060 = vsel %vm557, %v1042, %v1043
      %v1061 = vsel %vm557, %v1041, %v1042
      %v1062 = vsel %vm557, %v1040, %v1041
      %v1063 = vsel %vm557, %v1039, %v1040
      %v1064 = vsel %vm557, %v1038, %v1039
      %v1065 = vsel %vm557, %v1037, %v1038
      %v1066 = vsel %vm557, %v1036, %v1037
      %v1067 = vsel %vm557, %v1035, %v1036
      %v1068 = vsel %vm557, %v1034, %v1035
      %v1069 = vsel %vm557, %v1033, %v1034
      %v1070 = vsel %vm557, %v1032, %v1033
      %v1071 = vsel %vm557, %v1031, %v1032
      %v1072 = vsel %vm557, %v1030, %v1031
      %v1073 = vsel %vm557, %v1029, %v1030
      %v1074 = vsel %vm557, %v1028, %v1029
      %v1075 = vsel %vm557, %v1027, %v1028
      %v1076 = vadd.f32 %v915, %v1075
      %v1077 = vadd.f32 %v916, %v1074
      %v1078 = vadd.f32 %v917, %v1073
      %v1079 = vadd.f32 %v918, %v1072
      %v1080 = vadd.f32 %v919, %v1071
      %v1081 = vadd.f32 %v920, %v1070
      %v1082 = vadd.f32 %v921, %v1069
      %v1083 = vadd.f32 %v922, %v1068
      %v1084 = vadd.f32 %v923, %v1067
      %v1085 = vadd.f32 %v924, %v1066
      %v1086 = vadd.f32 %v925, %v1065
      %v1087 = vadd.f32 %v926, %v1064
      %v1088 = vadd.f32 %v927, %v1063
      %v1089 = vadd.f32 %v928, %v1062
      %v1090 = vadd.f32 %v929, %v1061
      %v1091 = vadd.f32 %v930, %v1060
      %v1092 = vadd.f32 %v931, %v1059
      %v1093 = vadd.f32 %v932, %v1058
      %v1094 = vadd.f32 %v933, %v1057
      %v1095 = vadd.f32 %v934, %v1056
      %v1096 = vadd.f32 %v935, %v1055
      %v1097 = vadd.f32 %v936, %v1054
      %v1098 = vadd.f32 %v937, %v1053
      %v1099 = vadd.f32 %v938, %v1052
      %s1100 = scalar_lea.vmem %s1, 40
      %v1101 = vld [vmem:[%s1100] sm:$0xf]
      %v1102 = vld [vmem:[%s1100 + $0x4] sm:$0xf]
      %v1105 = vunpack.c.l.b16 %v1101
      %v1106 = vunpack.c.l.b16 %v1102
      %v1107 = vpack.c.b16 %v1106, %v1105
      %1109 = vmatpush.bf16.msra.mxu0 0
      %1110 = vmatpush.bf16.msra.mxu0 0
      %1111 = vmatpush.bf16.msra.mxu0 0
      %1112 = vmatpush.bf16.msra.mxu0 0
      %1113 = vmatpush.bf16.msra.mxu0 0
      %1114 = vmatpush.bf16.msra.mxu0 0
      %1115 = vmatpush.bf16.msra.mxu0 0
      %1116 = vmatpush.bf16.msra.mxu0 %v1107
      %1117 = vmatmul.bf16.gmra.mxu0 %v407
      %v1118 = vpop.f32.mrf.mxu0
      %v1119 = vpop.f32.mrf.mxu0
      %1120 = vmatmul.bf16.gmra.mxu0 %v410
      %v1121 = vpop.f32.mrf.mxu0
      %v1122 = vpop.f32.mrf.mxu0
      %v1123 = vadd.f32 0.0, %v1122
      %1124 = vmatmul.bf16.gmra.mxu0 %v413
      %v1125 = vpop.f32.mrf.mxu0
      %v1126 = vadd.f32 0.0, %v1125
      %v1127 = vpop.f32.mrf.mxu0
      %v1128 = vadd.f32 0.0, %v1127
      %1129 = vmatmul.bf16.gmra.mxu0 %v416
      %v1130 = vpop.f32.mrf.mxu0
      %v1131 = vadd.f32 0.0, %v1130
      %v1132 = vpop.f32.mrf.mxu0
      %v1133 = vadd.f32 0.0, %v1132
      %1134 = vmatmul.bf16.gmra.mxu0 %v419
      %v1135 = vpop.f32.mrf.mxu0
      %v1136 = vadd.f32 0.0, %v1135
      %v1137 = vpop.f32.mrf.mxu0
      %v1138 = vadd.f32 0.0, %v1137
      %1139 = vmatmul.bf16.gmra.mxu0 %v422
      %v1140 = vpop.f32.mrf.mxu0
      %v1141 = vadd.f32 0.0, %v1140
      %v1142 = vpop.f32.mrf.mxu0
      %v1143 = vadd.f32 0.0, %v1142
      %1144 = vmatmul.bf16.gmra.mxu0 %v425
      %v1145 = vpop.f32.mrf.mxu0
      %v1146 = vadd.f32 0.0, %v1145
      %v1147 = vpop.f32.mrf.mxu0
      %v1148 = vadd.f32 0.0, %v1147
      %1149 = vmatmul.bf16.gmra.mxu0 %v428
      %v1150 = vpop.f32.mrf.mxu0
      %v1151 = vadd.f32 0.0, %v1150
      %v1152 = vpop.f32.mrf.mxu0
      %v1153 = vadd.f32 0.0, %v1152
      %1154 = vmatmul.bf16.gmra.mxu0 %v431
      %v1155 = vpop.f32.mrf.mxu0
      %v1156 = vadd.f32 0.0, %v1155
      %v1157 = vpop.f32.mrf.mxu0
      %v1158 = vadd.f32 0.0, %v1157
      %1159 = vmatmul.bf16.gmra.mxu0 %v434
      %v1160 = vpop.f32.mrf.mxu0
      %v1161 = vadd.f32 0.0, %v1160
      %v1162 = vpop.f32.mrf.mxu0
      %v1163 = vadd.f32 0.0, %v1162
      %1164 = vmatmul.bf16.gmra.mxu0 %v437
      %v1165 = vpop.f32.mrf.mxu0
      %v1166 = vadd.f32 0.0, %v1165
      %v1167 = vpop.f32.mrf.mxu0
      %v1168 = vadd.f32 0.0, %v1167
      %1169 = vmatmul.bf16.gmra.mxu0 %v440
      %v1170 = vpop.f32.mrf.mxu0
      %v1171 = vadd.f32 0.0, %v1170
      %v1172 = vpop.f32.mrf.mxu0
      %v1173 = vadd.f32 0.0, %v1172
      %1174 = vmatmul.bf16.gmra.mxu0 %v443
      %v1175 = vpop.f32.mrf.mxu0
      %v1176 = vadd.f32 0.0, %v1175
      %v1177 = vpop.f32.mrf.mxu0
      %v1178 = vadd.f32 0.0, %v1177
      %1179 = vmatmul.bf16.gmra.mxu0 %v446
      %v1180 = vpop.f32.mrf.mxu0
      %v1181 = vadd.f32 0.0, %v1180
      %v1182 = vpop.f32.mrf.mxu0
      %v1183 = vadd.f32 0.0, %v1182
      %1184 = vmatmul.bf16.gmra.mxu0 %v449
      %v1185 = vpop.f32.mrf.mxu0
      %v1186 = vpop.f32.mrf.mxu0
      %1187 = vdwg.mxu0
      %v1188 = vrot.slane %v1123, 2
      %v1189 = vrot.slane %v1126, 2
      %v1190 = vrot.slane %v1128, 2
      %v1191 = vrot.slane %v1131, 2
      %v1192 = vrot.slane %v1133, 2
      %v1193 = vrot.slane %v1136, 2
      %v1194 = vrot.slane %v1138, 2
      %v1195 = vrot.slane %v1141, 2
      %v1196 = vrot.slane %v1143, 2
      %v1197 = vrot.slane %v1146, 2
      %v1198 = vrot.slane %v1148, 2
      %v1199 = vrot.slane %v1151, 2
      %v1200 = vrot.slane %v1153, 2
      %v1201 = vrot.slane %v1156, 2
      %v1202 = vrot.slane %v1158, 2
      %v1203 = vrot.slane %v1161, 2
      %v1204 = vrot.slane %v1163, 2
      %v1205 = vrot.slane %v1166, 2
      %v1206 = vrot.slane %v1168, 2
      %v1207 = vrot.slane %v1171, 2
      %v1208 = vrot.slane %v1173, 2
      %v1209 = vrot.slane %v1176, 2
      %v1210 = vrot.slane %v1178, 2
      %v1211 = vrot.slane %v1181, 2
      %v1212 = vrot.slane %v1183, 2
      %v1213 = vsel %vm779, %v1211, %v1212
      %v1214 = vsel %vm779, %v1210, %v1211
      %v1215 = vsel %vm779, %v1209, %v1210
      %v1216 = vsel %vm779, %v1208, %v1209
      %v1217 = vsel %vm779, %v1207, %v1208
      %v1218 = vsel %vm779, %v1206, %v1207
      %v1219 = vsel %vm779, %v1205, %v1206
      %v1220 = vsel %vm779, %v1204, %v1205
      %v1221 = vsel %vm779, %v1203, %v1204
      %v1222 = vsel %vm779, %v1202, %v1203
      %v1223 = vsel %vm779, %v1201, %v1202
      %v1224 = vsel %vm779, %v1200, %v1201
      %v1225 = vsel %vm779, %v1199, %v1200
      %v1226 = vsel %vm779, %v1198, %v1199
      %v1227 = vsel %vm779, %v1197, %v1198
      %v1228 = vsel %vm779, %v1196, %v1197
      %v1229 = vsel %vm779, %v1195, %v1196
      %v1230 = vsel %vm779, %v1194, %v1195
      %v1231 = vsel %vm779, %v1193, %v1194
      %v1232 = vsel %vm779, %v1192, %v1193
      %v1233 = vsel %vm779, %v1191, %v1192
      %v1234 = vsel %vm779, %v1190, %v1191
      %v1235 = vsel %vm779, %v1189, %v1190
      %v1236 = vsel %vm779, %v1188, %v1189
      %v1237 = vadd.f32 %v1076, %v1236
      %v1238 = vadd.f32 %v1077, %v1235
      %v1239 = vadd.f32 %v1078, %v1234
      %v1240 = vadd.f32 %v1079, %v1233
      %v1241 = vadd.f32 %v1080, %v1232
      %v1242 = vadd.f32 %v1081, %v1231
      %v1243 = vadd.f32 %v1082, %v1230
      %v1244 = vadd.f32 %v1083, %v1229
      %v1245 = vadd.f32 %v1084, %v1228
      %v1246 = vadd.f32 %v1085, %v1227
      %v1247 = vadd.f32 %v1086, %v1226
      %v1248 = vadd.f32 %v1087, %v1225
      %v1249 = vadd.f32 %v1088, %v1224
      %v1250 = vadd.f32 %v1089, %v1223
      %v1251 = vadd.f32 %v1090, %v1222
      %v1252 = vadd.f32 %v1091, %v1221
      %v1253 = vadd.f32 %v1092, %v1220
      %v1254 = vadd.f32 %v1093, %v1219
      %v1255 = vadd.f32 %v1094, %v1218
      %v1256 = vadd.f32 %v1095, %v1217
      %v1257 = vadd.f32 %v1096, %v1216
      %v1258 = vadd.f32 %v1097, %v1215
      %v1259 = vadd.f32 %v1098, %v1214
      %v1260 = vadd.f32 %v1099, %v1213
      %s1261 = scalar_lea.vmem %s1, 48
      %v1262 = vld [vmem:[%s1261] sm:$0xf]
      %v1263 = vld [vmem:[%s1261 + $0x4] sm:$0xf]
      %v1266 = vunpack.c.l.b16 %v1262
      %v1267 = vunpack.c.l.b16 %v1263
      %v1268 = vpack.c.b16 %v1267, %v1266
      %1270 = vmatpush.bf16.msra.mxu0 0
      %1271 = vmatpush.bf16.msra.mxu0 0
      %1272 = vmatpush.bf16.msra.mxu0 0
      %1273 = vmatpush.bf16.msra.mxu0 0
      %1274 = vmatpush.bf16.msra.mxu0 0
      %1275 = vmatpush.bf16.msra.mxu0 0
      %1276 = vmatpush.bf16.msra.mxu0 0
      %1277 = vmatpush.bf16.msra.mxu0 %v1268
      %1278 = vmatmul.bf16.gmra.mxu0 %v407
      %v1279 = vpop.f32.mrf.mxu0
      %v1280 = vpop.f32.mrf.mxu0
      %1281 = vmatmul.bf16.gmra.mxu0 %v410
      %v1282 = vpop.f32.mrf.mxu0
      %v1283 = vpop.f32.mrf.mxu0
      %1284 = vmatmul.bf16.gmra.mxu0 %v413
      %v1285 = vpop.f32.mrf.mxu0
      %v1286 = vpop.f32.mrf.mxu0
      %1287 = vmatmul.bf16.gmra.mxu0 %v416
      %v1288 = vpop.f32.mrf.mxu0
      %v1289 = vadd.f32 0.0, %v1288
      %v1290 = vpop.f32.mrf.mxu0
      %v1291 = vadd.f32 0.0, %v1290
      %1292 = vmatmul.bf16.gmra.mxu0 %v419
      %v1293 = vpop.f32.mrf.mxu0
      %v1294 = vadd.f32 0.0, %v1293
      %v1295 = vpop.f32.mrf.mxu0
      %v1296 = vadd.f32 0.0, %v1295
      %1297 = vmatmul.bf16.gmra.mxu0 %v422
      %v1298 = vpop.f32.mrf.mxu0
      %v1299 = vadd.f32 0.0, %v1298
      %v1300 = vpop.f32.mrf.mxu0
      %v1301 = vadd.f32 0.0, %v1300
      %1302 = vmatmul.bf16.gmra.mxu0 %v425
      %v1303 = vpop.f32.mrf.mxu0
      %v1304 = vadd.f32 0.0, %v1303
      %v1305 = vpop.f32.mrf.mxu0
      %v1306 = vadd.f32 0.0, %v1305
      %1307 = vmatmul.bf16.gmra.mxu0 %v428
      %v1308 = vpop.f32.mrf.mxu0
      %v1309 = vadd.f32 0.0, %v1308
      %v1310 = vpop.f32.mrf.mxu0
      %v1311 = vadd.f32 0.0, %v1310
      %1312 = vmatmul.bf16.gmra.mxu0 %v431
      %v1313 = vpop.f32.mrf.mxu0
      %v1314 = vadd.f32 0.0, %v1313
      %v1315 = vpop.f32.mrf.mxu0
      %v1316 = vadd.f32 0.0, %v1315
      %1317 = vmatmul.bf16.gmra.mxu0 %v434
      %v1318 = vpop.f32.mrf.mxu0
      %v1319 = vadd.f32 0.0, %v1318
      %v1320 = vpop.f32.mrf.mxu0
      %v1321 = vadd.f32 0.0, %v1320
      %1322 = vmatmul.bf16.gmra.mxu0 %v437
      %v1323 = vpop.f32.mrf.mxu0
      %v1324 = vadd.f32 0.0, %v1323
      %v1325 = vpop.f32.mrf.mxu0
      %v1326 = vadd.f32 0.0, %v1325
      %1327 = vmatmul.bf16.gmra.mxu0 %v440
      %v1328 = vpop.f32.mrf.mxu0
      %v1329 = vadd.f32 0.0, %v1328
      %v1330 = vpop.f32.mrf.mxu0
      %v1331 = vadd.f32 0.0, %v1330
      %1332 = vmatmul.bf16.gmra.mxu0 %v443
      %v1333 = vpop.f32.mrf.mxu0
      %v1334 = vadd.f32 0.0, %v1333
      %v1335 = vpop.f32.mrf.mxu0
      %v1336 = vadd.f32 0.0, %v1335
      %1337 = vmatmul.bf16.gmra.mxu0 %v446
      %v1338 = vpop.f32.mrf.mxu0
      %v1339 = vadd.f32 0.0, %v1338
      %v1340 = vpop.f32.mrf.mxu0
      %v1341 = vadd.f32 0.0, %v1340
      %1342 = vmatmul.bf16.gmra.mxu0 %v449
      %v1343 = vpop.f32.mrf.mxu0
      %v1344 = vadd.f32 0.0, %v1343
      %v1345 = vpop.f32.mrf.mxu0
      %v1346 = vadd.f32 0.0, %v1345
      %1347 = vdwg.mxu0
      %v1348 = vadd.f32 %v1237, %v1289
      %v1349 = vadd.f32 %v1238, %v1291
      %v1350 = vadd.f32 %v1239, %v1294
      %v1351 = vadd.f32 %v1240, %v1296
      %v1352 = vadd.f32 %v1241, %v1299
      %v1353 = vadd.f32 %v1242, %v1301
      %v1354 = vadd.f32 %v1243, %v1304
      %v1355 = vadd.f32 %v1244, %v1306
      %v1356 = vadd.f32 %v1245, %v1309
      %v1357 = vadd.f32 %v1246, %v1311
      %v1358 = vadd.f32 %v1247, %v1314
      %v1359 = vadd.f32 %v1248, %v1316
      %v1360 = vadd.f32 %v1249, %v1319
      %v1361 = vadd.f32 %v1250, %v1321
      %v1362 = vadd.f32 %v1251, %v1324
      %v1363 = vadd.f32 %v1252, %v1326
      %v1364 = vadd.f32 %v1253, %v1329
      %v1365 = vadd.f32 %v1254, %v1331
      %v1366 = vadd.f32 %v1255, %v1334
      %v1367 = vadd.f32 %v1256, %v1336
      %v1368 = vadd.f32 %v1257, %v1339
      %v1369 = vadd.f32 %v1258, %v1341
      %v1370 = vadd.f32 %v1259, %v1344
      %v1371 = vadd.f32 %v1260, %v1346
      %s1372 = scalar_lea.vmem %s1, 56
      %v1373 = vld [vmem:[%s1372] sm:$0xf]
      %v1374 = vld [vmem:[%s1372 + $0x4] sm:$0xf]
      %v1377 = vunpack.c.l.b16 %v1373
      %v1378 = vunpack.c.l.b16 %v1374
      %v1379 = vpack.c.b16 %v1378, %v1377
      %1381 = vmatpush.bf16.msra.mxu0 0
      %1382 = vmatpush.bf16.msra.mxu0 0
      %1383 = vmatpush.bf16.msra.mxu0 0
      %1384 = vmatpush.bf16.msra.mxu0 0
      %1385 = vmatpush.bf16.msra.mxu0 0
      %1386 = vmatpush.bf16.msra.mxu0 0
      %1387 = vmatpush.bf16.msra.mxu0 0
      %1388 = vmatpush.bf16.msra.mxu0 %v1379
      %1389 = vmatmul.bf16.gmra.mxu0 %v407
      %v1390 = vpop.f32.mrf.mxu0
      %v1391 = vadd.f32 0.0, %v1390
      %v1392 = vpop.f32.mrf.mxu0
      %1393 = vmatmul.bf16.gmra.mxu0 %v410
      %v1394 = vpop.f32.mrf.mxu0
      %v1395 = vpop.f32.mrf.mxu0
      %1396 = vmatmul.bf16.gmra.mxu0 %v413
      %v1397 = vpop.f32.mrf.mxu0
      %v1398 = vpop.f32.mrf.mxu0
      %1399 = vmatmul.bf16.gmra.mxu0 %v416
      %v1400 = vpop.f32.mrf.mxu0
      %v1401 = vadd.f32 0.0, %v1400
      %v1402 = vpop.f32.mrf.mxu0
      %v1403 = vadd.f32 0.0, %v1402
      %1404 = vmatmul.bf16.gmra.mxu0 %v419
      %v1405 = vpop.f32.mrf.mxu0
      %v1406 = vadd.f32 0.0, %v1405
      %v1407 = vpop.f32.mrf.mxu0
      %v1408 = vadd.f32 0.0, %v1407
      %1409 = vmatmul.bf16.gmra.mxu0 %v422
      %v1410 = vpop.f32.mrf.mxu0
      %v1411 = vadd.f32 0.0, %v1410
      %v1412 = vpop.f32.mrf.mxu0
      %v1413 = vadd.f32 0.0, %v1412
      %1414 = vmatmul.bf16.gmra.mxu0 %v425
      %v1415 = vpop.f32.mrf.mxu0
      %v1416 = vadd.f32 0.0, %v1415
      %v1417 = vpop.f32.mrf.mxu0
      %v1418 = vadd.f32 0.0, %v1417
      %1419 = vmatmul.bf16.gmra.mxu0 %v428
      %v1420 = vpop.f32.mrf.mxu0
      %v1421 = vadd.f32 0.0, %v1420
      %v1422 = vpop.f32.mrf.mxu0
      %v1423 = vadd.f32 0.0, %v1422
      %1424 = vmatmul.bf16.gmra.mxu0 %v431
      %v1425 = vpop.f32.mrf.mxu0
      %v1426 = vadd.f32 0.0, %v1425
      %v1427 = vpop.f32.mrf.mxu0
      %v1428 = vadd.f32 0.0, %v1427
      %1429 = vmatmul.bf16.gmra.mxu0 %v434
      %v1430 = vpop.f32.mrf.mxu0
      %v1431 = vadd.f32 0.0, %v1430
      %v1432 = vpop.f32.mrf.mxu0
      %v1433 = vadd.f32 0.0, %v1432
      %1434 = vmatmul.bf16.gmra.mxu0 %v437
      %v1435 = vpop.f32.mrf.mxu0
      %v1436 = vadd.f32 0.0, %v1435
      %v1437 = vpop.f32.mrf.mxu0
      %v1438 = vadd.f32 0.0, %v1437
      %1439 = vmatmul.bf16.gmra.mxu0 %v440
      %v1440 = vpop.f32.mrf.mxu0
      %v1441 = vadd.f32 0.0, %v1440
      %v1442 = vpop.f32.mrf.mxu0
      %v1443 = vadd.f32 0.0, %v1442
      %1444 = vmatmul.bf16.gmra.mxu0 %v443
      %v1445 = vpop.f32.mrf.mxu0
      %v1446 = vadd.f32 0.0, %v1445
      %v1447 = vpop.f32.mrf.mxu0
      %v1448 = vadd.f32 0.0, %v1447
      %1449 = vmatmul.bf16.gmra.mxu0 %v446
      %v1450 = vpop.f32.mrf.mxu0
      %v1451 = vadd.f32 0.0, %v1450
      %v1452 = vpop.f32.mrf.mxu0
      %v1453 = vadd.f32 0.0, %v1452
      %1454 = vmatmul.bf16.gmra.mxu0 %v449
      %v1455 = vpop.f32.mrf.mxu0
      %v1456 = vadd.f32 0.0, %v1455
      %v1457 = vpop.f32.mrf.mxu0
      %v1458 = vadd.f32 0.0, %v1457
      %1459 = vdwg.mxu0
      %v1460 = vrot.slane %v1391, 1
      %v1461 = vrot.slane %v1401, 1
      %v1462 = vrot.slane %v1403, 1
      %v1463 = vrot.slane %v1406, 1
      %v1464 = vrot.slane %v1408, 1
      %v1465 = vrot.slane %v1411, 1
      %v1466 = vrot.slane %v1413, 1
      %v1467 = vrot.slane %v1416, 1
      %v1468 = vrot.slane %v1418, 1
      %v1469 = vrot.slane %v1421, 1
      %v1470 = vrot.slane %v1423, 1
      %v1471 = vrot.slane %v1426, 1
      %v1472 = vrot.slane %v1428, 1
      %v1473 = vrot.slane %v1431, 1
      %v1474 = vrot.slane %v1433, 1
      %v1475 = vrot.slane %v1436, 1
      %v1476 = vrot.slane %v1438, 1
      %v1477 = vrot.slane %v1441, 1
      %v1478 = vrot.slane %v1443, 1
      %v1479 = vrot.slane %v1446, 1
      %v1480 = vrot.slane %v1448, 1
      %v1481 = vrot.slane %v1451, 1
      %v1482 = vrot.slane %v1453, 1
      %v1483 = vrot.slane %v1456, 1
      %v1484 = vrot.slane %v1458, 1
      %v1485 = vsel %vm557, %v1483, %v1484
      %v1486 = vsel %vm557, %v1482, %v1483
      %v1487 = vsel %vm557, %v1481, %v1482
      %v1488 = vsel %vm557, %v1480, %v1481
      %v1489 = vsel %vm557, %v1479, %v1480
      %v1490 = vsel %vm557, %v1478, %v1479
      %v1491 = vsel %vm557, %v1477, %v1478
      %v1492 = vsel %vm557, %v1476, %v1477
      %v1493 = vsel %vm557, %v1475, %v1476
      %v1494 = vsel %vm557, %v1474, %v1475
      %v1495 = vsel %vm557, %v1473, %v1474
      %v1496 = vsel %vm557, %v1472, %v1473
      %v1497 = vsel %vm557, %v1471, %v1472
      %v1498 = vsel %vm557, %v1470, %v1471
      %v1499 = vsel %vm557, %v1469, %v1470
      %v1500 = vsel %vm557, %v1468, %v1469
      %v1501 = vsel %vm557, %v1467, %v1468
      %v1502 = vsel %vm557, %v1466, %v1467
      %v1503 = vsel %vm557, %v1465, %v1466
      %v1504 = vsel %vm557, %v1464, %v1465
      %v1505 = vsel %vm557, %v1463, %v1464
      %v1506 = vsel %vm557, %v1462, %v1463
      %v1507 = vsel %vm557, %v1461, %v1462
      %v1508 = vsel %vm557, %v1484, %v1460
      %v1509 = vadd.f32 %v1348, %v1507
      %v1510 = vadd.f32 %v1349, %v1506
      %v1511 = vadd.f32 %v1350, %v1505
      %v1512 = vadd.f32 %v1351, %v1504
      %v1513 = vadd.f32 %v1352, %v1503
      %v1514 = vadd.f32 %v1353, %v1502
      %v1515 = vadd.f32 %v1354, %v1501
      %v1516 = vadd.f32 %v1355, %v1500
      %v1517 = vadd.f32 %v1356, %v1499
      %v1518 = vadd.f32 %v1357, %v1498
      %v1519 = vadd.f32 %v1358, %v1497
      %v1520 = vadd.f32 %v1359, %v1496
      %v1521 = vadd.f32 %v1360, %v1495
      %v1522 = vadd.f32 %v1361, %v1494
      %v1523 = vadd.f32 %v1362, %v1493
      %v1524 = vadd.f32 %v1363, %v1492
      %v1525 = vadd.f32 %v1364, %v1491
      %v1526 = vadd.f32 %v1365, %v1490
      %v1527 = vadd.f32 %v1366, %v1489
      %v1528 = vadd.f32 %v1367, %v1488
      %v1529 = vadd.f32 %v1368, %v1487
      %v1530 = vadd.f32 %v1369, %v1486
      %v1531 = vadd.f32 %v1370, %v1485
      %v1532 = vadd.f32 %v1371, %v1508
      %s1533 = scalar_lea.vmem %s1, 64
      %v1534 = vld [vmem:[%s1533] sm:$0xf]
      %v1535 = vld [vmem:[%s1533 + $0x4] sm:$0xf]
      %v1538 = vunpack.c.l.b16 %v1534
      %v1539 = vunpack.c.l.b16 %v1535
      %v1540 = vpack.c.b16 %v1539, %v1538
      %1542 = vmatpush.bf16.msra.mxu0 0
      %1543 = vmatpush.bf16.msra.mxu0 0
      %1544 = vmatpush.bf16.msra.mxu0 0
      %1545 = vmatpush.bf16.msra.mxu0 0
      %1546 = vmatpush.bf16.msra.mxu0 0
      %1547 = vmatpush.bf16.msra.mxu0 0
      %1548 = vmatpush.bf16.msra.mxu0 0
      %1549 = vmatpush.bf16.msra.mxu0 %v1540
      %1550 = vmatmul.bf16.gmra.mxu0 %v407
      %v1551 = vpop.f32.mrf.mxu0
      %v1552 = vadd.f32 0.0, %v1551
      %v1553 = vpop.f32.mrf.mxu0
      %1554 = vmatmul.bf16.gmra.mxu0 %v410
      %v1555 = vpop.f32.mrf.mxu0
      %v1556 = vpop.f32.mrf.mxu0
      %1557 = vmatmul.bf16.gmra.mxu0 %v413
      %v1558 = vpop.f32.mrf.mxu0
      %v1559 = vpop.f32.mrf.mxu0
      %1560 = vmatmul.bf16.gmra.mxu0 %v416
      %v1561 = vpop.f32.mrf.mxu0
      %v1562 = vadd.f32 0.0, %v1561
      %v1563 = vpop.f32.mrf.mxu0
      %v1564 = vadd.f32 0.0, %v1563
      %1565 = vmatmul.bf16.gmra.mxu0 %v419
      %v1566 = vpop.f32.mrf.mxu0
      %v1567 = vadd.f32 0.0, %v1566
      %v1568 = vpop.f32.mrf.mxu0
      %v1569 = vadd.f32 0.0, %v1568
      %1570 = vmatmul.bf16.gmra.mxu0 %v422
      %v1571 = vpop.f32.mrf.mxu0
      %v1572 = vadd.f32 0.0, %v1571
      %v1573 = vpop.f32.mrf.mxu0
      %v1574 = vadd.f32 0.0, %v1573
      %1575 = vmatmul.bf16.gmra.mxu0 %v425
      %v1576 = vpop.f32.mrf.mxu0
      %v1577 = vadd.f32 0.0, %v1576
      %v1578 = vpop.f32.mrf.mxu0
      %v1579 = vadd.f32 0.0, %v1578
      %1580 = vmatmul.bf16.gmra.mxu0 %v428
      %v1581 = vpop.f32.mrf.mxu0
      %v1582 = vadd.f32 0.0, %v1581
      %v1583 = vpop.f32.mrf.mxu0
      %v1584 = vadd.f32 0.0, %v1583
      %1585 = vmatmul.bf16.gmra.mxu0 %v431
      %v1586 = vpop.f32.mrf.mxu0
      %v1587 = vadd.f32 0.0, %v1586
      %v1588 = vpop.f32.mrf.mxu0
      %v1589 = vadd.f32 0.0, %v1588
      %1590 = vmatmul.bf16.gmra.mxu0 %v434
      %v1591 = vpop.f32.mrf.mxu0
      %v1592 = vadd.f32 0.0, %v1591
      %v1593 = vpop.f32.mrf.mxu0
      %v1594 = vadd.f32 0.0, %v1593
      %1595 = vmatmul.bf16.gmra.mxu0 %v437
      %v1596 = vpop.f32.mrf.mxu0
      %v1597 = vadd.f32 0.0, %v1596
      %v1598 = vpop.f32.mrf.mxu0
      %v1599 = vadd.f32 0.0, %v1598
      %1600 = vmatmul.bf16.gmra.mxu0 %v440
      %v1601 = vpop.f32.mrf.mxu0
      %v1602 = vadd.f32 0.0, %v1601
      %v1603 = vpop.f32.mrf.mxu0
      %v1604 = vadd.f32 0.0, %v1603
      %1605 = vmatmul.bf16.gmra.mxu0 %v443
      %v1606 = vpop.f32.mrf.mxu0
      %v1607 = vadd.f32 0.0, %v1606
      %v1608 = vpop.f32.mrf.mxu0
      %v1609 = vadd.f32 0.0, %v1608
      %1610 = vmatmul.bf16.gmra.mxu0 %v446
      %v1611 = vpop.f32.mrf.mxu0
      %v1612 = vadd.f32 0.0, %v1611
      %v1613 = vpop.f32.mrf.mxu0
      %v1614 = vadd.f32 0.0, %v1613
      %1615 = vmatmul.bf16.gmra.mxu0 %v449
      %v1616 = vpop.f32.mrf.mxu0
      %v1617 = vadd.f32 0.0, %v1616
      %v1618 = vpop.f32.mrf.mxu0
      %v1619 = vadd.f32 0.0, %v1618
      %1620 = vdwg.mxu0
      %v1621 = vrot.slane %v1552, 2
      %v1622 = vrot.slane %v1562, 2
      %v1623 = vrot.slane %v1564, 2
      %v1624 = vrot.slane %v1567, 2
      %v1625 = vrot.slane %v1569, 2
      %v1626 = vrot.slane %v1572, 2
      %v1627 = vrot.slane %v1574, 2
      %v1628 = vrot.slane %v1577, 2
      %v1629 = vrot.slane %v1579, 2
      %v1630 = vrot.slane %v1582, 2
      %v1631 = vrot.slane %v1584, 2
      %v1632 = vrot.slane %v1587, 2
      %v1633 = vrot.slane %v1589, 2
      %v1634 = vrot.slane %v1592, 2
      %v1635 = vrot.slane %v1594, 2
      %v1636 = vrot.slane %v1597, 2
      %v1637 = vrot.slane %v1599, 2
      %v1638 = vrot.slane %v1602, 2
      %v1639 = vrot.slane %v1604, 2
      %v1640 = vrot.slane %v1607, 2
      %v1641 = vrot.slane %v1609, 2
      %v1642 = vrot.slane %v1612, 2
      %v1643 = vrot.slane %v1614, 2
      %v1644 = vrot.slane %v1617, 2
      %v1645 = vrot.slane %v1619, 2
      %v1646 = vsel %vm779, %v1644, %v1645
      %v1647 = vsel %vm779, %v1643, %v1644
      %v1648 = vsel %vm779, %v1642, %v1643
      %v1649 = vsel %vm779, %v1641, %v1642
      %v1650 = vsel %vm779, %v1640, %v1641
      %v1651 = vsel %vm779, %v1639, %v1640
      %v1652 = vsel %vm779, %v1638, %v1639
      %v1653 = vsel %vm779, %v1637, %v1638
      %v1654 = vsel %vm779, %v1636, %v1637
      %v1655 = vsel %vm779, %v1635, %v1636
      %v1656 = vsel %vm779, %v1634, %v1635
      %v1657 = vsel %vm779, %v1633, %v1634
      %v1658 = vsel %vm779, %v1632, %v1633
      %v1659 = vsel %vm779, %v1631, %v1632
      %v1660 = vsel %vm779, %v1630, %v1631
      %v1661 = vsel %vm779, %v1629, %v1630
      %v1662 = vsel %vm779, %v1628, %v1629
      %v1663 = vsel %vm779, %v1627, %v1628
      %v1664 = vsel %vm779, %v1626, %v1627
      %v1665 = vsel %vm779, %v1625, %v1626
      %v1666 = vsel %vm779, %v1624, %v1625
      %v1667 = vsel %vm779, %v1623, %v1624
      %v1668 = vsel %vm779, %v1622, %v1623
      %v1669 = vsel %vm779, %v1645, %v1621
      %v1670 = vadd.f32 %v1509, %v1668
      %v1671 = vadd.f32 %v1510, %v1667
      %v1672 = vadd.f32 %v1511, %v1666
      %v1673 = vadd.f32 %v1512, %v1665
      %v1674 = vadd.f32 %v1513, %v1664
      %v1675 = vadd.f32 %v1514, %v1663
      %v1676 = vadd.f32 %v1515, %v1662
      %v1677 = vadd.f32 %v1516, %v1661
      %v1678 = vadd.f32 %v1517, %v1660
      %v1679 = vadd.f32 %v1518, %v1659
      %v1680 = vadd.f32 %v1519, %v1658
      %v1681 = vadd.f32 %v1520, %v1657
      %v1682 = vadd.f32 %v1521, %v1656
      %v1683 = vadd.f32 %v1522, %v1655
      %v1684 = vadd.f32 %v1523, %v1654
      %v1685 = vadd.f32 %v1524, %v1653
      %v1686 = vadd.f32 %v1525, %v1652
      %v1687 = vadd.f32 %v1526, %v1651
      %v1688 = vadd.f32 %v1527, %v1650
      %v1689 = vadd.f32 %v1528, %v1649
      %v1690 = vadd.f32 %v1529, %v1648
      %v1691 = vadd.f32 %v1530, %v1647
      %v1692 = vadd.f32 %v1531, %v1646
      %v1693 = vadd.f32 %v1532, %v1669
      %v1694 = vld [vmem:[%s2] sm:$0x1]
      %v1696 = vperm.slane %v1694, 0
      %v1698 = vmul.f32 %v1670, %v1696
      %v1699 = vmul.f32 %v1671, %v1696
      %v1700 = vmul.f32 %v1672, %v1696
      %v1701 = vmul.f32 %v1673, %v1696
      %v1702 = vmul.f32 %v1674, %v1696
      %v1703 = vmul.f32 %v1675, %v1696
      %v1704 = vmul.f32 %v1676, %v1696
      %v1705 = vmul.f32 %v1677, %v1696
      %v1706 = vmul.f32 %v1678, %v1696
      %v1707 = vmul.f32 %v1679, %v1696
      %v1708 = vmul.f32 %v1680, %v1696
      %v1709 = vmul.f32 %v1681, %v1696
      %v1710 = vmul.f32 %v1682, %v1696
      %v1711 = vmul.f32 %v1683, %v1696
      %v1712 = vmul.f32 %v1684, %v1696
      %v1713 = vmul.f32 %v1685, %v1696
      %v1714 = vmul.f32 %v1686, %v1696
      %v1715 = vmul.f32 %v1687, %v1696
      %v1716 = vmul.f32 %v1688, %v1696
      %v1717 = vmul.f32 %v1689, %v1696
      %v1718 = vmul.f32 %v1690, %v1696
      %v1719 = vmul.f32 %v1691, %v1696
      %v1720 = vmul.f32 %v1692, %v1696
      %v1721 = vmul.f32 %v1693, %v1696
      %v1722 = vld [vmem:[%s3] sm:$0x1]
      %v1724 = vperm.slane %v1722, 0
      %v1726 = vadd.f32 %v1698, %v1724
      %v1727 = vadd.f32 %v1699, %v1724
      %v1728 = vadd.f32 %v1700, %v1724
      %v1729 = vadd.f32 %v1701, %v1724
      %v1730 = vadd.f32 %v1702, %v1724
      %v1731 = vadd.f32 %v1703, %v1724
      %v1732 = vadd.f32 %v1704, %v1724
      %v1733 = vadd.f32 %v1705, %v1724
      %v1734 = vadd.f32 %v1706, %v1724
      %v1735 = vadd.f32 %v1707, %v1724
      %v1736 = vadd.f32 %v1708, %v1724
      %v1737 = vadd.f32 %v1709, %v1724
      %v1738 = vadd.f32 %v1710, %v1724
      %v1739 = vadd.f32 %v1711, %v1724
      %v1740 = vadd.f32 %v1712, %v1724
      %v1741 = vadd.f32 %v1713, %v1724
      %v1742 = vadd.f32 %v1714, %v1724
      %v1743 = vadd.f32 %v1715, %v1724
      %v1744 = vadd.f32 %v1716, %v1724
      %v1745 = vadd.f32 %v1717, %v1724
      %v1746 = vadd.f32 %v1718, %v1724
      %v1747 = vadd.f32 %v1719, %v1724
      %v1748 = vadd.f32 %v1720, %v1724
      %v1749 = vadd.f32 %v1721, %v1724
      %v1750 = vmax.f32 %v1726, 0.0
      %v1751 = vmax.f32 %v1727, 0.0
      %v1752 = vmax.f32 %v1728, 0.0
      %v1753 = vmax.f32 %v1729, 0.0
      %v1754 = vmax.f32 %v1730, 0.0
      %v1755 = vmax.f32 %v1731, 0.0
      %v1756 = vmax.f32 %v1732, 0.0
      %v1757 = vmax.f32 %v1733, 0.0
      %v1758 = vmax.f32 %v1734, 0.0
      %v1759 = vmax.f32 %v1735, 0.0
      %v1760 = vmax.f32 %v1736, 0.0
      %v1761 = vmax.f32 %v1737, 0.0
      %v1762 = vmax.f32 %v1738, 0.0
      %v1763 = vmax.f32 %v1739, 0.0
      %v1764 = vmax.f32 %v1740, 0.0
      %v1765 = vmax.f32 %v1741, 0.0
      %v1766 = vmax.f32 %v1742, 0.0
      %v1767 = vmax.f32 %v1743, 0.0
      %v1768 = vmax.f32 %v1744, 0.0
      %v1769 = vmax.f32 %v1745, 0.0
      %v1770 = vmax.f32 %v1746, 0.0
      %v1771 = vmax.f32 %v1747, 0.0
      %v1772 = vmax.f32 %v1748, 0.0
      %v1773 = vmax.f32 %v1749, 0.0
      %v1774 = vpack.c.bf16 %v1751, %v1750
      %v1775 = vpack.c.bf16 %v1753, %v1752
      %v1776 = vpack.c.bf16 %v1755, %v1754
      %v1777 = vpack.c.bf16 %v1757, %v1756
      %v1778 = vpack.c.bf16 %v1759, %v1758
      %v1779 = vpack.c.bf16 %v1761, %v1760
      %v1780 = vpack.c.bf16 %v1763, %v1762
      %v1781 = vpack.c.bf16 %v1765, %v1764
      %v1782 = vpack.c.bf16 %v1767, %v1766
      %v1783 = vpack.c.bf16 %v1769, %v1768
      %v1784 = vpack.c.bf16 %v1771, %v1770
      %v1785 = vpack.c.bf16 %v1773, %v1772
      %v1786 = vld [vmem:[%s4] sm:$0xf]
      %v1787 = vld [vmem:[%s4 + $0x4] sm:$0xf]
      %v1788 = vld [vmem:[%s4 + $0x8] sm:$0xf]
      %v1789 = vld [vmem:[%s4 + $0xc] sm:$0xf]
      %v1790 = vld [vmem:[%s4 + $0x10] sm:$0xf]
      %v1791 = vld [vmem:[%s4 + $0x14] sm:$0xf]
      %v1792 = vld [vmem:[%s4 + $0x18] sm:$0xf]
      %v1793 = vld [vmem:[%s4 + $0x1c] sm:$0xf]
      %v1794 = vld [vmem:[%s4 + $0x20] sm:$0xf]
      %v1795 = vld [vmem:[%s4 + $0x24] sm:$0xf]
      %v1796 = vld [vmem:[%s4 + $0x28] sm:$0xf]
      %v1797 = vld [vmem:[%s4 + $0x2c] sm:$0xf]
      %v1798 = vld [vmem:[%s4 + $0x30] sm:$0xf]
      %v1799 = vld [vmem:[%s4 + $0x34] sm:$0xf]
      %v1800 = vld [vmem:[%s4 + $0x38] sm:$0xf]
      %v1801 = vld [vmem:[%s4 + $0x3c] sm:$0xf]
      %v1802 = vld [vmem:[%s5] sm:$0x1]
      %v1804 = vperm.slane %v1802, 0
      %v1822 = vunpack.c.l.b16 %v1786
      %v1823 = vunpack.c.l.b16 %v1787
      %v1824 = vunpack.c.l.b16 %v1788
      %v1825 = vunpack.c.l.b16 %v1789
      %v1826 = vunpack.c.l.b16 %v1790
      %v1827 = vunpack.c.l.b16 %v1791
      %v1828 = vunpack.c.l.b16 %v1792
      %v1829 = vunpack.c.l.b16 %v1793
      %v1830 = vunpack.c.l.b16 %v1794
      %v1831 = vunpack.c.l.b16 %v1795
      %v1832 = vunpack.c.l.b16 %v1796
      %v1833 = vunpack.c.l.b16 %v1797
      %v1834 = vunpack.c.l.b16 %v1798
      %v1835 = vunpack.c.l.b16 %v1799
      %v1836 = vunpack.c.l.b16 %v1800
      %v1837 = vunpack.c.l.b16 %v1801
      %v1838 = vpack.c.b16 %v1823, %v1822
      %v1839 = vpack.c.b16 %v1825, %v1824
      %v1840 = vpack.c.b16 %v1827, %v1826
      %v1841 = vpack.c.b16 %v1829, %v1828
      %v1842 = vpack.c.b16 %v1831, %v1830
      %v1843 = vpack.c.b16 %v1833, %v1832
      %v1844 = vpack.c.b16 %v1835, %v1834
      %v1845 = vpack.c.b16 %v1837, %v1836
      %1854 = vmatpush.bf16.msra.mxu0 %v1845
      %1855 = vmatpush.bf16.msra.mxu0 %v1844
      %1856 = vmatpush.bf16.msra.mxu0 %v1843
      %1857 = vmatpush.bf16.msra.mxu0 %v1842
      %1858 = vmatpush.bf16.msra.mxu0 %v1841
      %1859 = vmatpush.bf16.msra.mxu0 %v1840
      %1860 = vmatpush.bf16.msra.mxu0 %v1839
      %1861 = vmatpush.bf16.msra.mxu0 %v1838
      %1862 = vmatmul.bf16.gmra.mxu0 %v1774
      %v1863 = vpop.f32.mrf.mxu0
      %v1864 = vadd.f32 %v1804, %v1863
      %v1865 = vpop.f32.mrf.mxu0
      %v1866 = vadd.f32 %v1804, %v1865
      %1867 = vmatmul.bf16.gmra.mxu0 %v1775
      %v1868 = vpop.f32.mrf.mxu0
      %v1869 = vadd.f32 %v1804, %v1868
      %v1870 = vpop.f32.mrf.mxu0
      %v1871 = vadd.f32 %v1804, %v1870
      %1872 = vmatmul.bf16.gmra.mxu0 %v1776
      %v1873 = vpop.f32.mrf.mxu0
      %v1874 = vadd.f32 %v1804, %v1873
      %v1875 = vpop.f32.mrf.mxu0
      %v1876 = vadd.f32 %v1804, %v1875
      %1877 = vmatmul.bf16.gmra.mxu0 %v1777
      %v1878 = vpop.f32.mrf.mxu0
      %v1879 = vadd.f32 %v1804, %v1878
      %v1880 = vpop.f32.mrf.mxu0
      %v1881 = vadd.f32 %v1804, %v1880
      %1882 = vmatmul.bf16.gmra.mxu0 %v1778
      %v1883 = vpop.f32.mrf.mxu0
      %v1884 = vadd.f32 %v1804, %v1883
      %v1885 = vpop.f32.mrf.mxu0
      %v1886 = vadd.f32 %v1804, %v1885
      %1887 = vmatmul.bf16.gmra.mxu0 %v1779
      %v1888 = vpop.f32.mrf.mxu0
      %v1889 = vadd.f32 %v1804, %v1888
      %v1890 = vpop.f32.mrf.mxu0
      %v1891 = vadd.f32 %v1804, %v1890
      %1892 = vmatmul.bf16.gmra.mxu0 %v1780
      %v1893 = vpop.f32.mrf.mxu0
      %v1894 = vadd.f32 %v1804, %v1893
      %v1895 = vpop.f32.mrf.mxu0
      %v1896 = vadd.f32 %v1804, %v1895
      %1897 = vmatmul.bf16.gmra.mxu0 %v1781
      %v1898 = vpop.f32.mrf.mxu0
      %v1899 = vadd.f32 %v1804, %v1898
      %v1900 = vpop.f32.mrf.mxu0
      %v1901 = vadd.f32 %v1804, %v1900
      %1902 = vmatmul.bf16.gmra.mxu0 %v1782
      %v1903 = vpop.f32.mrf.mxu0
      %v1904 = vadd.f32 %v1804, %v1903
      %v1905 = vpop.f32.mrf.mxu0
      %v1906 = vadd.f32 %v1804, %v1905
      %1907 = vmatmul.bf16.gmra.mxu0 %v1783
      %v1908 = vpop.f32.mrf.mxu0
      %v1909 = vadd.f32 %v1804, %v1908
      %v1910 = vpop.f32.mrf.mxu0
      %v1911 = vadd.f32 %v1804, %v1910
      %1912 = vmatmul.bf16.gmra.mxu0 %v1784
      %v1913 = vpop.f32.mrf.mxu0
      %v1914 = vadd.f32 %v1804, %v1913
      %v1915 = vpop.f32.mrf.mxu0
      %v1916 = vadd.f32 %v1804, %v1915
      %1917 = vmatmul.bf16.gmra.mxu0 %v1785
      %v1918 = vpop.f32.mrf.mxu0
      %v1919 = vadd.f32 %v1804, %v1918
      %v1920 = vpop.f32.mrf.mxu0
      %v1921 = vadd.f32 %v1804, %v1920
      %1922 = vdwg.mxu0
      %1923 = vst [vmem:[%s287] sm:$0xff] %v1864
      %1924 = vst [vmem:[%s287 + $0x8] sm:$0xff] %v1866
      %1925 = vst [vmem:[%s287 + $0x10] sm:$0xff] %v1869
      %1926 = vst [vmem:[%s287 + $0x18] sm:$0xff] %v1871
      %1927 = vst [vmem:[%s287 + $0x20] sm:$0xff] %v1874
      %1928 = vst [vmem:[%s287 + $0x28] sm:$0xff] %v1876
      %1929 = vst [vmem:[%s287 + $0x30] sm:$0xff] %v1879
      %1930 = vst [vmem:[%s287 + $0x38] sm:$0xff] %v1881
      %1931 = vst [vmem:[%s287 + $0x40] sm:$0xff] %v1884
      %1932 = vst [vmem:[%s287 + $0x48] sm:$0xff] %v1886
      %1933 = vst [vmem:[%s287 + $0x50] sm:$0xff] %v1889
      %1934 = vst [vmem:[%s287 + $0x58] sm:$0xff] %v1891
      %1935 = vst [vmem:[%s287 + $0x60] sm:$0xff] %v1894
      %1936 = vst [vmem:[%s287 + $0x68] sm:$0xff] %v1896
      %1937 = vst [vmem:[%s287 + $0x70] sm:$0xff] %v1899
      %1938 = vst [vmem:[%s287 + $0x78] sm:$0xff] %v1901
      %1939 = vst [vmem:[%s287 + $0x80] sm:$0xff] %v1904
      %1940 = vst [vmem:[%s287 + $0x88] sm:$0xff] %v1906
      %1941 = vst [vmem:[%s287 + $0x90] sm:$0xff] %v1909
      %1942 = vst [vmem:[%s287 + $0x98] sm:$0xff] %v1911
      %1943 = vst [vmem:[%s287 + $0xa0] sm:$0xff] %v1914
      %1944 = vst [vmem:[%s287 + $0xa8] sm:$0xff] %v1916
      %1945 = vst [vmem:[%s287 + $0xb0] sm:$0xff] %v1919
      %1946 = vst [vmem:[%s287 + $0xb8] sm:$0xff] %v1921
      %p1947 = scmp.lt.s32.totalorder %s21, 1
      %s1948 = scalar_select %p1947, %s21, 1
      %p1949 = scmp.lt.s32.totalorder %s22, 1
      %s1950 = scalar_select %p1949, %s22, 1
      %s1951 = smul.addr %s1950, 24
      %s1952 = smul.addr %s1948, 48
      %s1953 = sadd.s32 %s1951, %s1952
      %s1954 = smul.addr %s1953, 8
      %s1955 = scalar_lea.vmem %s6, %s1954
      // Predicated region
      $region45: #{fcn_head_forward.1} parent=43 // pred_check
        %p1956 = pneg %p182
      $region46: #{fcn_head_forward.1} parent=43 // pred_check_branch
        %1958 = sbr.rel (%p1956) target = $region48
      $region47: #{fcn_head_forward.1} parent=43 // pred_region
        _
      $region48: #{fcn_head_forward.1} parent=43 // pred_fallthru
        _
    $region44: #{fcn_head_forward.1} parent=5 // pred_fallthru
      _
    %p1959 = scmp.le.s32.totalorder 2, %s12
    // Predicated region
    $region49: #{fcn_head_forward.1} parent=5 // pred_check
      %p1960 = pneg %p1959
    $region50: #{fcn_head_forward.1} parent=5 // pred_check_branch
      %1962 = sbr.rel (%p1960) target = $region52
    $region51: #{fcn_head_forward.1} parent=5 // pred_region
      %s1963 = ssub.s32 %s12, 2
      // Predicated region
      $region53: #{fcn_head_forward.1} parent=51 // pred_check
        %p1964 = pneg %p188
      $region54: #{fcn_head_forward.1} parent=51 // pred_check_branch
        %1966 = sbr.rel (%p1964) target = $region56
      $region55: #{fcn_head_forward.1} parent=51 // pred_region
        %p1967 = scmp.lt.s32.totalorder %s23, 1
        %s1968 = scalar_select %p1967, %s23, 1
        %p1969 = scmp.lt.s32.totalorder %s24, 1
        %s1970 = scalar_select %p1969, %s24, 1
        %s1971 = smul.addr %s1970, 24
        %s1972 = smul.addr %s1968, 48
        %s1973 = sadd.s32 %s1971, %s1972
        %s1974 = smul.addr %s1973, 8
        %s1975 = scalar_lea.vmem %s6, %s1974
      $region56: #{fcn_head_forward.1} parent=51 // pred_fallthru
        _
    $region52: #{fcn_head_forward.1} parent=5 // pred_fallthru
      _
  $region6: #{fcn_head_forward.1} parent=0 // loop_footer
    %s16 = sadd.s32 1, %s12
  $region7: #{fcn_head_forward.1} parent=0 // loop_footer_branch
    %11 = sbr.rel target = $region3
  $region8: #{fcn_head_forward.1} parent=0 // loop_exit
    _

</llo_original>
